<compile_context>
chip_gen: v5e
topology: v5e:2x2
jax: 0.10.0
libtpu: 0.0.40
codegen_flags: <defaults>
</compile_context>

<pallas_src>
import math

import jax
import jax.numpy as jnp
import numpy as np
from jax import lax
from jax.experimental import pallas as pl
from jax.experimental.pallas import tpu as pltpu

# ----------------------- static problem dims (from Net.__init__, 28x28 input)
H0 = W0 = 28            # input spatial
K = 3                   # conv kernel size (both convs)
K5 = 5                  # composed conv1∘conv2 kernel size
C1 = 7                  # conv1 out channels
C2 = 9                  # conv2 out channels
H1 = W1 = H0 - K + 1    # 26
H2 = W2 = H1 - K + 1    # 24
HP = WP = H2 // 2       # 12 (after 2x2 max-pool)
F_IN = HP * WP * C2     # 1296
F_HID = 50
F_OUT = 10
CPAD = 128              # lane-dense padding for each pooled-column half
FPAD = 128              # lane-dense padding for the FC head
NEG = -1e30             # "minus infinity" bias for padded class lanes

BT = 128                # max batch tile per grid step (multiple of 8)


# ---------------------------------------------------------------------------
# The single fused kernel: one batch tile, everything stays in VMEM.
# ---------------------------------------------------------------------------
def _fused_net_kernel(x_ref, a5_ref, cb2_ref, wfc2_ref, bfc2_ref,
                      wfc_ref, bfc_ref, out_ref):
    bt = x_ref.shape[1]
    # x block: (H0, bt, W0) -> 2D slab (H0*bt, W0); rows ordered (h, b).
    # bt is a multiple of 8, so this reshape is a tile-aligned relabeling.
    x = x_ref[...].reshape(H0 * bt, W0)

    # ---- composed conv1∘conv2 (effective 5x5 conv, biases folded): 5 banded
    #      bf16 MXU matmuls into one f32 accumulator.  Lanes [0,128) hold the
    #      even output columns, lanes [128,256) the odd ones.
    acc = None
    for di in range(K5):
        xs = x[di * bt:(di + H2) * bt, :].astype(jnp.bfloat16)  # rows (i+di, b)
        t = jnp.dot(xs, a5_ref[di], preferred_element_type=jnp.float32)
        acc = t if acc is None else acc + t                     # (H2*bt, 256)
    acc = acc + cb2_ref[...]

    # ---- relu + 2x2 max-pool, fully fused:
    #      W-pool = max of the even/odd lane halves (128-aligned free slices),
    #      H-pool = max over the adjacent row pair (tile-aligned reshape).
    m = jnp.maximum(jnp.maximum(acc[:, :CPAD], acc[:, CPAD:]), 0.0)
    pooled = jnp.max(m.reshape(HP, 2, bt, CPAD), axis=1)        # (HP, bt, 128)

    # ---- fc2 (+ relu). Weight rows were pre-permuted / lane-padded on the
    #      host so the pooled layout is consumed directly (no relayout).
    # TODO(synk): F.dropout(x, 0.2) is implemented as inference-mode identity.
    h = None
    for p in range(HP):
        t = jnp.dot(pooled[p].astype(jnp.bfloat16), wfc2_ref[p],
                    preferred_element_type=jnp.float32)
        h = t if h is None else h + t                           # (bt, 128)
    h = jnp.maximum(h + bfc2_ref[...], 0.0)

    # ---- fc + softmax in f32; padded class lanes carry a -1e30 bias so they
    #      get exactly zero probability.  Exact divide for tight parity.
    z = jnp.dot(h.astype(jnp.bfloat16), wfc_ref[...],
                preferred_element_type=jnp.float32) + bfc_ref[...]
    z = z - jnp.max(z, axis=-1, keepdims=True)
    e = jnp.exp(z)
    out_ref[...] = e / jnp.sum(e, axis=-1, keepdims=True)       # lane-dense store


# ---------------------------------------------------------------------------
# Wrapper: layout plumbing (cheap, fused by XLA) + the pallas_call.
# ---------------------------------------------------------------------------
def fused_net_forward(x_nchw, prep):
    """x_nchw: (N, 1, 28, 28) float32 -> (N, 10) softmax probabilities."""
    n = x_nchw.shape[0]
    assert x_nchw.shape[1:] == (1, H0, W0)
    bt = min(BT, max(8, -(-n // 8) * 8))       # batch tile (multiple of 8)
    npad = -(-n // bt) * bt

    # Squeeze C=1, pad the batch, and put H major so the kernel's matmul M
    # dimension is (row, batch) with batch on the sublanes (one tiny copy).
    x = x_nchw.reshape(n, H0, W0).astype(jnp.float32)
    x = jnp.pad(x, ((0, npad - n), (0, 0), (0, 0)))
    x_t = jnp.transpose(x, (1, 0, 2))          # (H0, npad, W0)

    out = pl.pallas_call(
        _fused_net_kernel,
        out_shape=jax.ShapeDtypeStruct((npad, FPAD), jnp.float32),
        grid_spec=pltpu.PrefetchScalarGridSpec(
            num_scalar_prefetch=0,
            grid=(npad // bt,),
            in_specs=[
                pl.BlockSpec((H0, bt, W0), lambda i: (0, i, 0)),        # input
                pl.BlockSpec((K5, W0, 2 * CPAD), lambda i: (0, 0, 0)),  # conv bands
                pl.BlockSpec((1, 2 * CPAD), lambda i: (0, 0)),          # conv bias
                pl.BlockSpec((HP, CPAD, FPAD), lambda i: (0, 0, 0)),    # fc2 W
                pl.BlockSpec((1, FPAD), lambda i: (0, 0)),              # fc2 b
                pl.BlockSpec((FPAD, FPAD), lambda i: (0, 0)),           # fc W
                pl.BlockSpec((1, FPAD), lambda i: (0, 0)),              # fc b
            ],
            out_specs=pl.BlockSpec((bt, FPAD), lambda i: (i, 0)),
        ),
        compiler_params=pltpu.CompilerParams(
            dimension_semantics=("parallel",),   # batch tiles -> both TCs on v7x
            vmem_limit_bytes=32 * 1024 * 1024,   # ~9 MB used; safe on all gens
        ),
    )(x_t, prep["a5"], prep["cb2"], prep["wfc2"], prep["bfc2"],
      prep["wfc"], prep["bfc"])
    return out[:n, :F_OUT]


# ---------------------------------------------------------------------------
# One-time host-side repack: compose conv1∘conv2 into a 5x5 conv and build the
# banded / permuted / lane-padded bf16 matrices the fused kernel consumes.
# ---------------------------------------------------------------------------
def prepare_params(params):
    w1 = np.asarray(params["conv1_w"], np.float32)   # (C1, 1, K, K)
    b1 = np.asarray(params["conv1_b"], np.float32)   # (C1,)
    w2 = np.asarray(params["conv2_w"], np.float32)   # (C2, C1, K, K)
    b2 = np.asarray(params["conv2_b"], np.float32)   # (C2,)
    wfc2 = np.asarray(params["fc2_w"], np.float32)   # (50, 1296)
    bfc2 = np.asarray(params["fc2_b"], np.float32)   # (50,)
    wfc = np.asarray(params["fc_w"], np.float32)     # (10, 50)
    bfc = np.asarray(params["fc_b"], np.float32)     # (10,)

    # Compose conv1∘conv2 -> one 5x5 cross-correlation kernel per out channel.
    # NOTE: valid ONLY because the model has no nonlinearity between the convs.
    w5 = np.zeros((C2, K5, K5), np.float32)
    for a in range(K):              # conv2 tap
        for b in range(K):
            for c in range(C1):
                w5[:, a:a + K, b:b + K] += np.einsum(
                    "o,ij->oij", w2[:, c, a, b], w1[c, 0])
    b_eff = b2 + np.einsum("ocij,c->o", w2, b1)      # conv1 bias folded in

    # Banded matrices for the composed conv; even / odd output columns each
    # padded to 128 lanes and concatenated. Lane within a half = q*C2 + o.
    a5e = np.zeros((K5, W0, WP, C2), np.float32)
    a5o = np.zeros((K5, W0, WP, C2), np.float32)
    for di in range(K5):
        for dj in range(K5):
            for q in range(WP):
                a5e[di, 2 * q + dj, q, :] += w5[:, di, dj]
                a5o[di, 2 * q + 1 + dj, q, :] += w5[:, di, dj]
    lane_pad = ((0, 0), (0, 0), (0, CPAD - WP * C2))
    a5 = np.concatenate(
        [np.pad(a5e.reshape(K5, W0, WP * C2), lane_pad),
         np.pad(a5o.reshape(K5, W0, WP * C2), lane_pad)], axis=-1)  # (5,28,256)

    cb_half = np.pad(np.tile(b_eff, WP), (0, CPAD - WP * C2))
    cb2 = np.concatenate([cb_half, cb_half]).reshape(1, 2 * CPAD)

    # fc2: permute the 1296 inputs from torch's (C,H,W) flatten order to the
    # kernel's (p, q*C2 + c) layout, pad 108 -> 128 rows and 50 -> 128 lanes.
    wr = wfc2.reshape(F_HID, C2, HP, WP).transpose(2, 3, 1, 0)   # (p, q, c, f)
    wr = wr.reshape(HP, WP * C2, F_HID)
    wr = np.pad(wr, ((0, 0), (0, CPAD - WP * C2), (0, FPAD - F_HID)))
    bfc2_p = np.pad(bfc2, (0, FPAD - F_HID)).reshape(1, FPAD)

    # final fc: (10, 50) -> (128, 128); padded class lanes get a -1e30 f32 bias
    # so the in-kernel softmax assigns them exactly zero probability.
    wf = np.zeros((FPAD, FPAD), np.float32)
    wf[:F_HID, :F_OUT] = wfc.T
    bf = np.full((1, FPAD), NEG, np.float32)
    bf[0, :F_OUT] = bfc

    return dict(
        a5=jnp.asarray(a5, jnp.bfloat16),       # bf16 MXU operands
        cb2=jnp.asarray(cb2, jnp.float32),      # f32 bias / accumulator math
        wfc2=jnp.asarray(wr, jnp.bfloat16),
        bfc2=jnp.asarray(bfc2_p, jnp.float32),
        wfc=jnp.asarray(wf, jnp.bfloat16),
        bfc=jnp.asarray(bf, jnp.float32),
    )


# ---------------------------------------------------------------------------
# Pure-JAX reference of the PyTorch forward (for a self-check) + param init.
# ---------------------------------------------------------------------------
def reference_forward(x_nchw, params):
    dn = ("NCHW", "OIHW", "NCHW")
    y = lax.conv_general_dilated(x_nchw, params["conv1_w"], (1, 1), "VALID",
                                 dimension_numbers=dn)
    y = y + params["conv1_b"][None, :, None, None]
    y = lax.conv_general_dilated(y, params["conv2_w"], (1, 1), "VALID",
                                 dimension_numbers=dn)
    y = y + params["conv2_b"][None, :, None, None]
    y = jnp.maximum(y, 0.0)
    n = y.shape[0]
    y = y.reshape(n, C2, HP, 2, WP, 2).max(axis=(3, 5))      # 2x2 max-pool
    f = y.reshape(n, F_IN)                                   # torch .view order
    h = jnp.maximum(f @ params["fc2_w"].T + params["fc2_b"], 0.0)
    z = h @ params["fc_w"].T + params["fc_b"]
    return jax.nn.softmax(z, axis=-1)


def init_params(key):
    ks = jax.random.split(key, 8)

    def u(k, shape, fan_in):
        bound = 1.0 / math.sqrt(fan_in)
        return jax.random.uniform(k, shape, jnp.float32, -bound, bound)

    return dict(
        conv1_w=u(ks[0], (C1, 1, K, K), 1 * K * K),
        conv1_b=u(ks[1], (C1,), 1 * K * K),
        conv2_w=u(ks[2], (C2, C1, K, K), C1 * K * K),
        conv2_b=u(ks[3], (C2,), C1 * K * K),
        fc2_w=u(ks[4], (F_HID, F_IN), F_IN),
        fc2_b=u(ks[5], (F_HID,), F_IN),
        fc_w=u(ks[6], (F_OUT, F_HID), F_HID),
        fc_b=u(ks[7], (F_OUT,), F_HID),
    )


if __name__ == "__main__":
    key = jax.random.PRNGKey(0)
    pkey, xkey = jax.random.split(key)
    params = init_params(pkey)
    prep = prepare_params(params)            # one-time host-side repack

    # 28x28 input is required by the hard-coded fc dims (out3 = 12); batch = 2.
    x = jax.random.normal(xkey, (2, 1, H0, W0), jnp.float32)

    run = jax.jit(fused_net_forward)
    out = jax.block_until_ready(run(x, prep))

    assert out.shape == (2, F_OUT)
    assert bool(jnp.all(jnp.isfinite(out)))
    # softmax rows must sum to 1 (exact divide -> tight tolerance)
    assert bool(jnp.allclose(jnp.sum(out, axis=1), 1.0, atol=1e-3))
    # end-to-end check against a plain-JAX f32 reference of the torch forward
    # (bf16 MXU operands -> slightly relaxed tolerance on the probabilities)
    ref = reference_forward(x, params)
    assert bool(jnp.allclose(out, ref, atol=2e-2)), (
        "max |diff| = %g" % float(jnp.max(jnp.abs(out - ref))))
    print("KERNEL_OK")
</pallas_src>

<mosaic_0001>
module attributes {stable_mosaic.version = 11 : i64} {
  func.func @_fused_net_kernel(%arg0: i32, %arg1: memref<28x8x28xf32, #tpu.memory_space<vmem>>, %arg2: memref<5x28x256xbf16, #tpu.memory_space<vmem>>, %arg3: memref<1x256xf32, #tpu.memory_space<vmem>>, %arg4: memref<12x128x128xbf16, #tpu.memory_space<vmem>>, %arg5: memref<1x128xf32, #tpu.memory_space<vmem>>, %arg6: memref<128x128xbf16, #tpu.memory_space<vmem>>, %arg7: memref<1x128xf32, #tpu.memory_space<vmem>>, %arg8: memref<8x128xf32, #tpu.memory_space<vmem>>) attributes {dimension_semantics = [#tpu.dimension_semantics<parallel>], iteration_bounds = array<i64: 1>, scalar_prefetch = 0 : i64, scratch_operands = 0 : i64, tpu.core_type = #tpu.core_type<tc>, window_params = [{transform_indices = @transform_0, window_bounds = array<i64: 28, 8, 28>}, {pipeline_mode = #tpu.pipeline_mode<synchronous>, transform_indices = @transform_1, window_bounds = array<i64: 5, 28, 256>}, {pipeline_mode = #tpu.pipeline_mode<synchronous>, transform_indices = @transform_2, window_bounds = array<i64: 1, 256>}, {pipeline_mode = #tpu.pipeline_mode<synchronous>, transform_indices = @transform_3, window_bounds = array<i64: 12, 128, 128>}, {pipeline_mode = #tpu.pipeline_mode<synchronous>, transform_indices = @transform_4, window_bounds = array<i64: 1, 128>}, {pipeline_mode = #tpu.pipeline_mode<synchronous>, transform_indices = @transform_5, window_bounds = array<i64: 128, 128>}, {pipeline_mode = #tpu.pipeline_mode<synchronous>, transform_indices = @transform_6, window_bounds = array<i64: 1, 128>}, {transform_indices = @transform_7, window_bounds = array<i64: 8, 128>}]} {
    %c0 = arith.constant 0 : index
    %c0_0 = arith.constant 0 : index
    %c0_1 = arith.constant 0 : index
    %0 = vector.load %arg1[%c0, %c0_0, %c0_1] : memref<28x8x28xf32, #tpu.memory_space<vmem>>, vector<28x8x28xf32>
    %1 = vector.shape_cast %0 : vector<28x8x28xf32> to vector<224x28xf32>
    %2 = vector.extract_strided_slice %1 {offsets = [0, 0], sizes = [192, 28], strides = [1, 1]} : vector<224x28xf32> to vector<192x28xf32>
    %3 = arith.truncf %2 : vector<192x28xf32> to vector<192x28xbf16>
    %c0_2 = arith.constant 0 : index
    %c0_3 = arith.constant 0 : index
    %c0_4 = arith.constant 0 : index
    %4 = vector.load %arg2[%c0_2, %c0_3, %c0_4] : memref<5x28x256xbf16, #tpu.memory_space<vmem>>, vector<1x28x256xbf16>
    %5 = vector.shape_cast %4 : vector<1x28x256xbf16> to vector<28x256xbf16>
    %cst = arith.constant dense<0.000000e+00> : vector<192x256xf32>
    %6 = tpu.matmul %3, %5, %cst {dimension_numbers = #tpu.dot_dimension_numbers<[1], [0], [0], [1], [0, 0, 1, 1], [], []>} : vector<192x28xbf16>, vector<28x256xbf16>, vector<192x256xf32> -> vector<192x256xf32>
    %7 = vector.extract_strided_slice %1 {offsets = [8, 0], sizes = [192, 28], strides = [1, 1]} : vector<224x28xf32> to vector<192x28xf32>
    %8 = arith.truncf %7 : vector<192x28xf32> to vector<192x28xbf16>
    %c1 = arith.constant 1 : index
    %c0_5 = arith.constant 0 : index
    %c0_6 = arith.constant 0 : index
    %9 = vector.load %arg2[%c1, %c0_5, %c0_6] : memref<5x28x256xbf16, #tpu.memory_space<vmem>>, vector<1x28x256xbf16>
    %10 = vector.shape_cast %9 : vector<1x28x256xbf16> to vector<28x256xbf16>
    %cst_7 = arith.constant dense<0.000000e+00> : vector<192x256xf32>
    %11 = tpu.matmul %8, %10, %cst_7 {dimension_numbers = #tpu.dot_dimension_numbers<[1], [0], [0], [1], [0, 0, 1, 1], [], []>} : vector<192x28xbf16>, vector<28x256xbf16>, vector<192x256xf32> -> vector<192x256xf32>
    %12 = arith.addf %6, %11 : vector<192x256xf32>
    %13 = vector.extract_strided_slice %1 {offsets = [16, 0], sizes = [192, 28], strides = [1, 1]} : vector<224x28xf32> to vector<192x28xf32>
    %14 = arith.truncf %13 : vector<192x28xf32> to vector<192x28xbf16>
    %c2 = arith.constant 2 : index
    %c0_8 = arith.constant 0 : index
    %c0_9 = arith.constant 0 : index
    %15 = vector.load %arg2[%c2, %c0_8, %c0_9] : memref<5x28x256xbf16, #tpu.memory_space<vmem>>, vector<1x28x256xbf16>
    %16 = vector.shape_cast %15 : vector<1x28x256xbf16> to vector<28x256xbf16>
    %cst_10 = arith.constant dense<0.000000e+00> : vector<192x256xf32>
    %17 = tpu.matmul %14, %16, %cst_10 {dimension_numbers = #tpu.dot_dimension_numbers<[1], [0], [0], [1], [0, 0, 1, 1], [], []>} : vector<192x28xbf16>, vector<28x256xbf16>, vector<192x256xf32> -> vector<192x256xf32>
    %18 = arith.addf %12, %17 : vector<192x256xf32>
    %19 = vector.extract_strided_slice %1 {offsets = [24, 0], sizes = [192, 28], strides = [1, 1]} : vector<224x28xf32> to vector<192x28xf32>
    %20 = arith.truncf %19 : vector<192x28xf32> to vector<192x28xbf16>
    %c3 = arith.constant 3 : index
    %c0_11 = arith.constant 0 : index
    %c0_12 = arith.constant 0 : index
    %21 = vector.load %arg2[%c3, %c0_11, %c0_12] : memref<5x28x256xbf16, #tpu.memory_space<vmem>>, vector<1x28x256xbf16>
    %22 = vector.shape_cast %21 : vector<1x28x256xbf16> to vector<28x256xbf16>
    %cst_13 = arith.constant dense<0.000000e+00> : vector<192x256xf32>
    %23 = tpu.matmul %20, %22, %cst_13 {dimension_numbers = #tpu.dot_dimension_numbers<[1], [0], [0], [1], [0, 0, 1, 1], [], []>} : vector<192x28xbf16>, vector<28x256xbf16>, vector<192x256xf32> -> vector<192x256xf32>
    %24 = arith.addf %18, %23 : vector<192x256xf32>
    %25 = vector.extract_strided_slice %1 {offsets = [32, 0], sizes = [192, 28], strides = [1, 1]} : vector<224x28xf32> to vector<192x28xf32>
    %26 = arith.truncf %25 : vector<192x28xf32> to vector<192x28xbf16>
    %c4 = arith.constant 4 : index
    %c0_14 = arith.constant 0 : index
    %c0_15 = arith.constant 0 : index
    %27 = vector.load %arg2[%c4, %c0_14, %c0_15] : memref<5x28x256xbf16, #tpu.memory_space<vmem>>, vector<1x28x256xbf16>
    %28 = vector.shape_cast %27 : vector<1x28x256xbf16> to vector<28x256xbf16>
    %cst_16 = arith.constant dense<0.000000e+00> : vector<192x256xf32>
    %29 = tpu.matmul %26, %28, %cst_16 {dimension_numbers = #tpu.dot_dimension_numbers<[1], [0], [0], [1], [0, 0, 1, 1], [], []>} : vector<192x28xbf16>, vector<28x256xbf16>, vector<192x256xf32> -> vector<192x256xf32>
    %30 = arith.addf %24, %29 : vector<192x256xf32>
    %c0_17 = arith.constant 0 : index
    %c0_18 = arith.constant 0 : index
    %31 = vector.load %arg3[%c0_17, %c0_18] : memref<1x256xf32, #tpu.memory_space<vmem>>, vector<1x256xf32>
    %32 = vector.broadcast %31 : vector<1x256xf32> to vector<192x256xf32>
    %33 = arith.addf %30, %32 : vector<192x256xf32>
    %34 = vector.extract_strided_slice %33 {offsets = [0, 0], sizes = [192, 128], strides = [1, 1]} : vector<192x256xf32> to vector<192x128xf32>
    %35 = vector.extract_strided_slice %33 {offsets = [0, 128], sizes = [192, 128], strides = [1, 1]} : vector<192x256xf32> to vector<192x128xf32>
    %36 = arith.maximumf %34, %35 : vector<192x128xf32>
    %cst_19 = arith.constant 0.000000e+00 : f32
    %37 = vector.broadcast %cst_19 : f32 to vector<192x128xf32>
    %38 = arith.maximumf %36, %37 : vector<192x128xf32>
    %39 = vector.shape_cast %38 : vector<192x128xf32> to vector<12x2x8x128xf32>
    %cst_20 = arith.constant dense<0xFF800000> : vector<12x8x128xf32>
    %40 = vector.multi_reduction <maximumf>, %39, %cst_20 [1] : vector<12x2x8x128xf32> to vector<12x8x128xf32>
    %41 = vector.extract_strided_slice %40 {offsets = [0, 0, 0], sizes = [1, 8, 128], strides = [1, 1, 1]} : vector<12x8x128xf32> to vector<1x8x128xf32>
    %42 = vector.shape_cast %41 : vector<1x8x128xf32> to vector<8x128xf32>
    %43 = arith.truncf %42 : vector<8x128xf32> to vector<8x128xbf16>
    %c0_21 = arith.constant 0 : index
    %c0_22 = arith.constant 0 : index
    %c0_23 = arith.constant 0 : index
    %44 = vector.load %arg4[%c0_21, %c0_22, %c0_23] : memref<12x128x128xbf16, #tpu.memory_space<vmem>>, vector<1x128x128xbf16>
    %45 = vector.shape_cast %44 : vector<1x128x128xbf16> to vector<128x128xbf16>
    %cst_24 = arith.constant dense<0.000000e+00> : vector<8x128xf32>
    %46 = tpu.matmul %43, %45, %cst_24 {dimension_numbers = #tpu.dot_dimension_numbers<[1], [0], [0], [1], [0, 0, 1, 1], [], []>} : vector<8x128xbf16>, vector<128x128xbf16>, vector<8x128xf32> -> vector<8x128xf32>
    %47 = vector.extract_strided_slice %40 {offsets = [1, 0, 0], sizes = [1, 8, 128], strides = [1, 1, 1]} : vector<12x8x128xf32> to vector<1x8x128xf32>
    %48 = vector.shape_cast %47 : vector<1x8x128xf32> to vector<8x128xf32>
    %49 = arith.truncf %48 : vector<8x128xf32> to vector<8x128xbf16>
    %c1_25 = arith.constant 1 : index
    %c0_26 = arith.constant 0 : index
    %c0_27 = arith.constant 0 : index
    %50 = vector.load %arg4[%c1_25, %c0_26, %c0_27] : memref<12x128x128xbf16, #tpu.memory_space<vmem>>, vector<1x128x128xbf16>
    %51 = vector.shape_cast %50 : vector<1x128x128xbf16> to vector<128x128xbf16>
    %cst_28 = arith.constant dense<0.000000e+00> : vector<8x128xf32>
    %52 = tpu.matmul %49, %51, %cst_28 {dimension_numbers = #tpu.dot_dimension_numbers<[1], [0], [0], [1], [0, 0, 1, 1], [], []>} : vector<8x128xbf16>, vector<128x128xbf16>, vector<8x128xf32> -> vector<8x128xf32>
    %53 = arith.addf %46, %52 : vector<8x128xf32>
    %54 = vector.extract_strided_slice %40 {offsets = [2, 0, 0], sizes = [1, 8, 128], strides = [1, 1, 1]} : vector<12x8x128xf32> to vector<1x8x128xf32>
    %55 = vector.shape_cast %54 : vector<1x8x128xf32> to vector<8x128xf32>
    %56 = arith.truncf %55 : vector<8x128xf32> to vector<8x128xbf16>
    %c2_29 = arith.constant 2 : index
    %c0_30 = arith.constant 0 : index
    %c0_31 = arith.constant 0 : index
    %57 = vector.load %arg4[%c2_29, %c0_30, %c0_31] : memref<12x128x128xbf16, #tpu.memory_space<vmem>>, vector<1x128x128xbf16>
    %58 = vector.shape_cast %57 : vector<1x128x128xbf16> to vector<128x128xbf16>
    %cst_32 = arith.constant dense<0.000000e+00> : vector<8x128xf32>
    %59 = tpu.matmul %56, %58, %cst_32 {dimension_numbers = #tpu.dot_dimension_numbers<[1], [0], [0], [1], [0, 0, 1, 1], [], []>} : vector<8x128xbf16>, vector<128x128xbf16>, vector<8x128xf32> -> vector<8x128xf32>
    %60 = arith.addf %53, %59 : vector<8x128xf32>
    %61 = vector.extract_strided_slice %40 {offsets = [3, 0, 0], sizes = [1, 8, 128], strides = [1, 1, 1]} : vector<12x8x128xf32> to vector<1x8x128xf32>
    %62 = vector.shape_cast %61 : vector<1x8x128xf32> to vector<8x128xf32>
    %63 = arith.truncf %62 : vector<8x128xf32> to vector<8x128xbf16>
    %c3_33 = arith.constant 3 : index
    %c0_34 = arith.constant 0 : index
    %c0_35 = arith.constant 0 : index
    %64 = vector.load %arg4[%c3_33, %c0_34, %c0_35] : memref<12x128x128xbf16, #tpu.memory_space<vmem>>, vector<1x128x128xbf16>
    %65 = vector.shape_cast %64 : vector<1x128x128xbf16> to vector<128x128xbf16>
    %cst_36 = arith.constant dense<0.000000e+00> : vector<8x128xf32>
    %66 = tpu.matmul %63, %65, %cst_36 {dimension_numbers = #tpu.dot_dimension_numbers<[1], [0], [0], [1], [0, 0, 1, 1], [], []>} : vector<8x128xbf16>, vector<128x128xbf16>, vector<8x128xf32> -> vector<8x128xf32>
    %67 = arith.addf %60, %66 : vector<8x128xf32>
    %68 = vector.extract_strided_slice %40 {offsets = [4, 0, 0], sizes = [1, 8, 128], strides = [1, 1, 1]} : vector<12x8x128xf32> to vector<1x8x128xf32>
    %69 = vector.shape_cast %68 : vector<1x8x128xf32> to vector<8x128xf32>
    %70 = arith.truncf %69 : vector<8x128xf32> to vector<8x128xbf16>
    %c4_37 = arith.constant 4 : index
    %c0_38 = arith.constant 0 : index
    %c0_39 = arith.constant 0 : index
    %71 = vector.load %arg4[%c4_37, %c0_38, %c0_39] : memref<12x128x128xbf16, #tpu.memory_space<vmem>>, vector<1x128x128xbf16>
    %72 = vector.shape_cast %71 : vector<1x128x128xbf16> to vector<128x128xbf16>
    %cst_40 = arith.constant dense<0.000000e+00> : vector<8x128xf32>
    %73 = tpu.matmul %70, %72, %cst_40 {dimension_numbers = #tpu.dot_dimension_numbers<[1], [0], [0], [1], [0, 0, 1, 1], [], []>} : vector<8x128xbf16>, vector<128x128xbf16>, vector<8x128xf32> -> vector<8x128xf32>
    %74 = arith.addf %67, %73 : vector<8x128xf32>
    %75 = vector.extract_strided_slice %40 {offsets = [5, 0, 0], sizes = [1, 8, 128], strides = [1, 1, 1]} : vector<12x8x128xf32> to vector<1x8x128xf32>
    %76 = vector.shape_cast %75 : vector<1x8x128xf32> to vector<8x128xf32>
    %77 = arith.truncf %76 : vector<8x128xf32> to vector<8x128xbf16>
    %c5 = arith.constant 5 : index
    %c0_41 = arith.constant 0 : index
    %c0_42 = arith.constant 0 : index
    %78 = vector.load %arg4[%c5, %c0_41, %c0_42] : memref<12x128x128xbf16, #tpu.memory_space<vmem>>, vector<1x128x128xbf16>
    %79 = vector.shape_cast %78 : vector<1x128x128xbf16> to vector<128x128xbf16>
    %cst_43 = arith.constant dense<0.000000e+00> : vector<8x128xf32>
    %80 = tpu.matmul %77, %79, %cst_43 {dimension_numbers = #tpu.dot_dimension_numbers<[1], [0], [0], [1], [0, 0, 1, 1], [], []>} : vector<8x128xbf16>, vector<128x128xbf16>, vector<8x128xf32> -> vector<8x128xf32>
    %81 = arith.addf %74, %80 : vector<8x128xf32>
    %82 = vector.extract_strided_slice %40 {offsets = [6, 0, 0], sizes = [1, 8, 128], strides = [1, 1, 1]} : vector<12x8x128xf32> to vector<1x8x128xf32>
    %83 = vector.shape_cast %82 : vector<1x8x128xf32> to vector<8x128xf32>
    %84 = arith.truncf %83 : vector<8x128xf32> to vector<8x128xbf16>
    %c6 = arith.constant 6 : index
    %c0_44 = arith.constant 0 : index
    %c0_45 = arith.constant 0 : index
    %85 = vector.load %arg4[%c6, %c0_44, %c0_45] : memref<12x128x128xbf16, #tpu.memory_space<vmem>>, vector<1x128x128xbf16>
    %86 = vector.shape_cast %85 : vector<1x128x128xbf16> to vector<128x128xbf16>
    %cst_46 = arith.constant dense<0.000000e+00> : vector<8x128xf32>
    %87 = tpu.matmul %84, %86, %cst_46 {dimension_numbers = #tpu.dot_dimension_numbers<[1], [0], [0], [1], [0, 0, 1, 1], [], []>} : vector<8x128xbf16>, vector<128x128xbf16>, vector<8x128xf32> -> vector<8x128xf32>
    %88 = arith.addf %81, %87 : vector<8x128xf32>
    %89 = vector.extract_strided_slice %40 {offsets = [7, 0, 0], sizes = [1, 8, 128], strides = [1, 1, 1]} : vector<12x8x128xf32> to vector<1x8x128xf32>
    %90 = vector.shape_cast %89 : vector<1x8x128xf32> to vector<8x128xf32>
    %91 = arith.truncf %90 : vector<8x128xf32> to vector<8x128xbf16>
    %c7 = arith.constant 7 : index
    %c0_47 = arith.constant 0 : index
    %c0_48 = arith.constant 0 : index
    %92 = vector.load %arg4[%c7, %c0_47, %c0_48] : memref<12x128x128xbf16, #tpu.memory_space<vmem>>, vector<1x128x128xbf16>
    %93 = vector.shape_cast %92 : vector<1x128x128xbf16> to vector<128x128xbf16>
    %cst_49 = arith.constant dense<0.000000e+00> : vector<8x128xf32>
    %94 = tpu.matmul %91, %93, %cst_49 {dimension_numbers = #tpu.dot_dimension_numbers<[1], [0], [0], [1], [0, 0, 1, 1], [], []>} : vector<8x128xbf16>, vector<128x128xbf16>, vector<8x128xf32> -> vector<8x128xf32>
    %95 = arith.addf %88, %94 : vector<8x128xf32>
    %96 = vector.extract_strided_slice %40 {offsets = [8, 0, 0], sizes = [1, 8, 128], strides = [1, 1, 1]} : vector<12x8x128xf32> to vector<1x8x128xf32>
    %97 = vector.shape_cast %96 : vector<1x8x128xf32> to vector<8x128xf32>
    %98 = arith.truncf %97 : vector<8x128xf32> to vector<8x128xbf16>
    %c8 = arith.constant 8 : index
    %c0_50 = arith.constant 0 : index
    %c0_51 = arith.constant 0 : index
    %99 = vector.load %arg4[%c8, %c0_50, %c0_51] : memref<12x128x128xbf16, #tpu.memory_space<vmem>>, vector<1x128x128xbf16>
    %100 = vector.shape_cast %99 : vector<1x128x128xbf16> to vector<128x128xbf16>
    %cst_52 = arith.constant dense<0.000000e+00> : vector<8x128xf32>
    %101 = tpu.matmul %98, %100, %cst_52 {dimension_numbers = #tpu.dot_dimension_numbers<[1], [0], [0], [1], [0, 0, 1, 1], [], []>} : vector<8x128xbf16>, vector<128x128xbf16>, vector<8x128xf32> -> vector<8x128xf32>
    %102 = arith.addf %95, %101 : vector<8x128xf32>
    %103 = vector.extract_strided_slice %40 {offsets = [9, 0, 0], sizes = [1, 8, 128], strides = [1, 1, 1]} : vector<12x8x128xf32> to vector<1x8x128xf32>
    %104 = vector.shape_cast %103 : vector<1x8x128xf32> to vector<8x128xf32>
    %105 = arith.truncf %104 : vector<8x128xf32> to vector<8x128xbf16>
    %c9 = arith.constant 9 : index
    %c0_53 = arith.constant 0 : index
    %c0_54 = arith.constant 0 : index
    %106 = vector.load %arg4[%c9, %c0_53, %c0_54] : memref<12x128x128xbf16, #tpu.memory_space<vmem>>, vector<1x128x128xbf16>
    %107 = vector.shape_cast %106 : vector<1x128x128xbf16> to vector<128x128xbf16>
    %cst_55 = arith.constant dense<0.000000e+00> : vector<8x128xf32>
    %108 = tpu.matmul %105, %107, %cst_55 {dimension_numbers = #tpu.dot_dimension_numbers<[1], [0], [0], [1], [0, 0, 1, 1], [], []>} : vector<8x128xbf16>, vector<128x128xbf16>, vector<8x128xf32> -> vector<8x128xf32>
    %109 = arith.addf %102, %108 : vector<8x128xf32>
    %110 = vector.extract_strided_slice %40 {offsets = [10, 0, 0], sizes = [1, 8, 128], strides = [1, 1, 1]} : vector<12x8x128xf32> to vector<1x8x128xf32>
    %111 = vector.shape_cast %110 : vector<1x8x128xf32> to vector<8x128xf32>
    %112 = arith.truncf %111 : vector<8x128xf32> to vector<8x128xbf16>
    %c10 = arith.constant 10 : index
    %c0_56 = arith.constant 0 : index
    %c0_57 = arith.constant 0 : index
    %113 = vector.load %arg4[%c10, %c0_56, %c0_57] : memref<12x128x128xbf16, #tpu.memory_space<vmem>>, vector<1x128x128xbf16>
    %114 = vector.shape_cast %113 : vector<1x128x128xbf16> to vector<128x128xbf16>
    %cst_58 = arith.constant dense<0.000000e+00> : vector<8x128xf32>
    %115 = tpu.matmul %112, %114, %cst_58 {dimension_numbers = #tpu.dot_dimension_numbers<[1], [0], [0], [1], [0, 0, 1, 1], [], []>} : vector<8x128xbf16>, vector<128x128xbf16>, vector<8x128xf32> -> vector<8x128xf32>
    %116 = arith.addf %109, %115 : vector<8x128xf32>
    %117 = vector.extract_strided_slice %40 {offsets = [11, 0, 0], sizes = [1, 8, 128], strides = [1, 1, 1]} : vector<12x8x128xf32> to vector<1x8x128xf32>
    %118 = vector.shape_cast %117 : vector<1x8x128xf32> to vector<8x128xf32>
    %119 = arith.truncf %118 : vector<8x128xf32> to vector<8x128xbf16>
    %c11 = arith.constant 11 : index
    %c0_59 = arith.constant 0 : index
    %c0_60 = arith.constant 0 : index
    %120 = vector.load %arg4[%c11, %c0_59, %c0_60] : memref<12x128x128xbf16, #tpu.memory_space<vmem>>, vector<1x128x128xbf16>
    %121 = vector.shape_cast %120 : vector<1x128x128xbf16> to vector<128x128xbf16>
    %cst_61 = arith.constant dense<0.000000e+00> : vector<8x128xf32>
    %122 = tpu.matmul %119, %121, %cst_61 {dimension_numbers = #tpu.dot_dimension_numbers<[1], [0], [0], [1], [0, 0, 1, 1], [], []>} : vector<8x128xbf16>, vector<128x128xbf16>, vector<8x128xf32> -> vector<8x128xf32>
    %123 = arith.addf %116, %122 : vector<8x128xf32>
    %c0_62 = arith.constant 0 : index
    %c0_63 = arith.constant 0 : index
    %124 = vector.load %arg5[%c0_62, %c0_63] : memref<1x128xf32, #tpu.memory_space<vmem>>, vector<1x128xf32>
    %125 = vector.broadcast %124 : vector<1x128xf32> to vector<8x128xf32>
    %126 = arith.addf %123, %125 : vector<8x128xf32>
    %cst_64 = arith.constant 0.000000e+00 : f32
    %127 = vector.broadcast %cst_64 : f32 to vector<8x128xf32>
    %128 = arith.maximumf %126, %127 : vector<8x128xf32>
    %129 = arith.truncf %128 : vector<8x128xf32> to vector<8x128xbf16>
    %c0_65 = arith.constant 0 : index
    %c0_66 = arith.constant 0 : index
    %130 = vector.load %arg6[%c0_65, %c0_66] : memref<128x128xbf16, #tpu.memory_space<vmem>>, vector<128x128xbf16>
    %cst_67 = arith.constant dense<0.000000e+00> : vector<8x128xf32>
    %131 = tpu.matmul %129, %130, %cst_67 {dimension_numbers = #tpu.dot_dimension_numbers<[1], [0], [0], [1], [0, 0, 1, 1], [], []>} : vector<8x128xbf16>, vector<128x128xbf16>, vector<8x128xf32> -> vector<8x128xf32>
    %c0_68 = arith.constant 0 : index
    %c0_69 = arith.constant 0 : index
    %132 = vector.load %arg7[%c0_68, %c0_69] : memref<1x128xf32, #tpu.memory_space<vmem>>, vector<1x128xf32>
    %133 = vector.broadcast %132 : vector<1x128xf32> to vector<8x128xf32>
    %134 = arith.addf %131, %133 : vector<8x128xf32>
    %cst_70 = arith.constant dense<0xFF800000> : vector<8xf32>
    %135 = vector.multi_reduction <maximumf>, %134, %cst_70 [1] : vector<8x128xf32> to vector<8xf32>
    %136 = vector.shape_cast %135 : vector<8xf32> to vector<8x1xf32>
    %137 = vector.broadcast %136 : vector<8x1xf32> to vector<8x128xf32>
    %138 = arith.subf %134, %137 : vector<8x128xf32>
    %139 = math.exp %138 : vector<8x128xf32>
    %cst_71 = arith.constant dense<0.000000e+00> : vector<8xf32>
    %140 = vector.multi_reduction <add>, %139, %cst_71 [1] : vector<8x128xf32> to vector<8xf32>
    %141 = vector.shape_cast %140 : vector<8xf32> to vector<8x1xf32>
    %142 = vector.broadcast %141 : vector<8x1xf32> to vector<8x128xf32>
    %143 = arith.divf %139, %142 : vector<8x128xf32>
    %c0_72 = arith.constant 0 : index
    %c0_73 = arith.constant 0 : index
    %144 = vector.load %arg8[%c0_72, %c0_73] : memref<8x128xf32, #tpu.memory_space<vmem>>, vector<8x128xf32>
    tpu.vector_store %arg8[%c0_72, %c0_73], %143 {strides = array<i32>} : memref<8x128xf32, #tpu.memory_space<vmem>>, vector<8x128xf32>,
    return
  }
  func.func @transform_0(%arg0: i32) -> (i32, i32, i32) {
    %c0_i32 = arith.constant 0 : i32
    %c0_i32_0 = arith.constant 0 : i32
    %c0_i32_1 = arith.constant 0 : i32
    return %c0_i32, %arg0, %c0_i32_0 : i32, i32, i32
  }
  func.func @transform_1(%arg0: i32) -> (i32, i32, i32) {
    %c0_i32 = arith.constant 0 : i32
    %c0_i32_0 = arith.constant 0 : i32
    %c0_i32_1 = arith.constant 0 : i32
    %c0_i32_2 = arith.constant 0 : i32
    return %c0_i32, %c0_i32_0, %c0_i32_1 : i32, i32, i32
  }
  func.func @transform_2(%arg0: i32) -> (i32, i32) {
    %c0_i32 = arith.constant 0 : i32
    %c0_i32_0 = arith.constant 0 : i32
    %c0_i32_1 = arith.constant 0 : i32
    return %c0_i32, %c0_i32_0 : i32, i32
  }
  func.func @transform_3(%arg0: i32) -> (i32, i32, i32) {
    %c0_i32 = arith.constant 0 : i32
    %c0_i32_0 = arith.constant 0 : i32
    %c0_i32_1 = arith.constant 0 : i32
    %c0_i32_2 = arith.constant 0 : i32
    return %c0_i32, %c0_i32_0, %c0_i32_1 : i32, i32, i32
  }
  func.func @transform_4(%arg0: i32) -> (i32, i32) {
    %c0_i32 = arith.constant 0 : i32
    %c0_i32_0 = arith.constant 0 : i32
    %c0_i32_1 = arith.constant 0 : i32
    return %c0_i32, %c0_i32_0 : i32, i32
  }
  func.func @transform_5(%arg0: i32) -> (i32, i32) {
    %c0_i32 = arith.constant 0 : i32
    %c0_i32_0 = arith.constant 0 : i32
    %c0_i32_1 = arith.constant 0 : i32
    return %c0_i32, %c0_i32_0 : i32, i32
  }
  func.func @transform_6(%arg0: i32) -> (i32, i32) {
    %c0_i32 = arith.constant 0 : i32
    %c0_i32_0 = arith.constant 0 : i32
    %c0_i32_1 = arith.constant 0 : i32
    return %c0_i32, %c0_i32_0 : i32, i32
  }
  func.func @transform_7(%arg0: i32) -> (i32, i32) {
    %c0_i32 = arith.constant 0 : i32
    %c0_i32_0 = arith.constant 0 : i32
    return %arg0, %c0_i32 : i32, i32
  }
}

</mosaic_0001>

<llo_original>
// kernel: fused_net_forward.1
$region0: #{fused_net_forward.1}
  #allocation0 [shape = 'u32[]', space=smem, size = 0x4, offset = 0x4, fixed_abs, tag = 'smem constant byte address 0x4 - core index']
  #allocation1 [shape = 'u32[72,128]{1,0:T(1,128)}', space=vmem, size = 0x9000, scoped, tag = 'internal scratch']
  %s0 = inlined_call_operand.vmem [shape: f32[28,8,28], index: 0, kind: input, shape index: {}]
  %s1 = inlined_call_operand.vmem [shape: bf16[5,28,256], index: 1, kind: input, shape index: {}]
  %s2 = inlined_call_operand.vmem [shape: f32[1,256], index: 2, kind: input, shape index: {}]
  %s3 = inlined_call_operand.hbm [shape: bf16[12,128,128], index: 3, kind: input, shape index: {}]
  %s4 = inlined_call_operand.vmem [shape: f32[1,128], index: 4, kind: input, shape index: {}]
  %s5 = inlined_call_operand.vmem [shape: bf16[128,128], index: 5, kind: input, shape index: {}]
  %s6 = inlined_call_operand.vmem [shape: f32[1,128], index: 6, kind: input, shape index: {}]
  %s7 = inlined_call_operand.vmem [shape: f32[8,128], index: 7, kind: output, shape index: {}]
  %s8 = sld [smem:[#allocation0]]
  $region42: #{fused_net_forward.1} parent=0
    _
  %s10 = ssub.s32 1, %s8
  %s11 = scalar_select 0, %s10, %s8
  $region1: #{fused_net_forward.1} parent=0
    #allocation2 [shape = 'u8[393216]{0}', space=vmem, size = 0x60000, scoped, tag = 'input window, operand 3, single buffered']
    #allocation3 [shape = 's32[1]{0}', space=sflag, size = 0x4, scoped, tag = 'scoped memory for fused_net_forward.1']
    %12 = vsyncpa [#allocation3], 0
    // Predicated region
    $region2: #{fused_net_forward.1} parent=1 // pred_check
      _
    $region3: #{fused_net_forward.1} parent=1 // pred_check_branch
      %14 = sbr.rel (0) target = $region5
    $region4: #{fused_net_forward.1} parent=1 // pred_region
      _
    $region5: #{fused_net_forward.1} parent=1 // pred_fallthru
      _
    // Predicated region
    $region6: #{fused_net_forward.1} parent=1 // pred_check
      _
    $region7: #{fused_net_forward.1} parent=1 // pred_check_branch
      %16 = sbr.rel (0) target = $region9
    $region8: #{fused_net_forward.1} parent=1 // pred_region
      _
    $region9: #{fused_net_forward.1} parent=1 // pred_fallthru
      _
    // Predicated region
    $region10: #{fused_net_forward.1} parent=1 // pred_check
      _
    $region11: #{fused_net_forward.1} parent=1 // pred_check_branch
      %18 = sbr.rel (0) target = $region13
    $region12: #{fused_net_forward.1} parent=1 // pred_region
      _
    $region13: #{fused_net_forward.1} parent=1 // pred_fallthru
      _
    // Predicated region
    $region14: #{fused_net_forward.1} parent=1 // pred_check
      _
    $region15: #{fused_net_forward.1} parent=1 // pred_check_branch
      %20 = sbr.rel (0) target = $region17
    $region16: #{fused_net_forward.1} parent=1 // pred_region
      %22 = vsyncadd [#allocation3], 0
      %s23 = sshll.u32 %s3, 4
      %s24 = int_to_ptr.hbm [resolvable:$true] %s23
      %s25 = sshll.u32 [#allocation2], 4
      %s26 = int_to_ptr.vmem [resolvable:$true] %s25
      %31 = dma.hbm_to_vmem [thread:$0]  %s24, 12288, %s26, [#allocation3], 64, 64, 4
    $region17: #{fused_net_forward.1} parent=1 // pred_fallthru
      _
    // Predicated region
    $region18: #{fused_net_forward.1} parent=1 // pred_check
      _
    $region19: #{fused_net_forward.1} parent=1 // pred_check_branch
      %33 = sbr.rel (0) target = $region21
    $region20: #{fused_net_forward.1} parent=1 // pred_region
      _
    $region21: #{fused_net_forward.1} parent=1 // pred_fallthru
      _
    // Predicated region
    $region22: #{fused_net_forward.1} parent=1 // pred_check
      _
    $region23: #{fused_net_forward.1} parent=1 // pred_check_branch
      %35 = sbr.rel (0) target = $region25
    $region24: #{fused_net_forward.1} parent=1 // pred_region
      _
    $region25: #{fused_net_forward.1} parent=1 // pred_fallthru
      _
    // Predicated region
    $region26: #{fused_net_forward.1} parent=1 // pred_check
      _
    $region27: #{fused_net_forward.1} parent=1 // pred_check_branch
      %37 = sbr.rel (0) target = $region29
    $region28: #{fused_net_forward.1} parent=1 // pred_region
      _
    $region29: #{fused_net_forward.1} parent=1 // pred_fallthru
      _
    // Predicated region
    $region30: #{fused_net_forward.1} parent=1 // pred_check
      _
    $region31: #{fused_net_forward.1} parent=1 // pred_check_branch
      %39 = sbr.rel (0) target = $region33
    $region32: #{fused_net_forward.1} parent=1 // pred_region
      %41 = dma.done [#allocation3], 12288
    $region33: #{fused_net_forward.1} parent=1 // pred_fallthru
      _
    %v43 = vld [vmem:[%s0] sm:$0xff]
    %v44 = vld [vmem:[%s0 + $0x8] sm:$0xff]
    %v45 = vld [vmem:[%s0 + $0x10] sm:$0xff]
    %v46 = vld [vmem:[%s0 + $0x18] sm:$0xff]
    %v47 = vld [vmem:[%s0 + $0x20] sm:$0xff]
    %v48 = vld [vmem:[%s0 + $0x28] sm:$0xff]
    %v49 = vld [vmem:[%s0 + $0x30] sm:$0xff]
    %v50 = vld [vmem:[%s0 + $0x38] sm:$0xff]
    %v51 = vld [vmem:[%s0 + $0x40] sm:$0xff]
    %v52 = vld [vmem:[%s0 + $0x48] sm:$0xff]
    %v53 = vld [vmem:[%s0 + $0x50] sm:$0xff]
    %v54 = vld [vmem:[%s0 + $0x58] sm:$0xff]
    %v55 = vld [vmem:[%s0 + $0x60] sm:$0xff]
    %v56 = vld [vmem:[%s0 + $0x68] sm:$0xff]
    %v57 = vld [vmem:[%s0 + $0x70] sm:$0xff]
    %v58 = vld [vmem:[%s0 + $0x78] sm:$0xff]
    %v59 = vld [vmem:[%s0 + $0x80] sm:$0xff]
    %v60 = vld [vmem:[%s0 + $0x88] sm:$0xff]
    %v61 = vld [vmem:[%s0 + $0x90] sm:$0xff]
    %v62 = vld [vmem:[%s0 + $0x98] sm:$0xff]
    %v63 = vld [vmem:[%s0 + $0xa0] sm:$0xff]
    %v64 = vld [vmem:[%s0 + $0xa8] sm:$0xff]
    %v65 = vld [vmem:[%s0 + $0xb0] sm:$0xff]
    %v66 = vld [vmem:[%s0 + $0xb8] sm:$0xff]
    %v67 = vld [vmem:[%s0 + $0xc0] sm:$0xff]
    %v68 = vld [vmem:[%s0 + $0xc8] sm:$0xff]
    %v69 = vld [vmem:[%s0 + $0xd0] sm:$0xff]
    %v70 = vld [vmem:[%s0 + $0xd8] sm:$0xff]
    %v71 = vpack.c.bf16 %v44, %v43
    %v72 = vpack.c.bf16 %v46, %v45
    %v73 = vpack.c.bf16 %v48, %v47
    %v74 = vpack.c.bf16 %v50, %v49
    %v75 = vpack.c.bf16 %v52, %v51
    %v76 = vpack.c.bf16 %v54, %v53
    %v77 = vpack.c.bf16 %v56, %v55
    %v78 = vpack.c.bf16 %v58, %v57
    %v79 = vpack.c.bf16 %v60, %v59
    %v80 = vpack.c.bf16 %v62, %v61
    %v81 = vpack.c.bf16 %v64, %v63
    %v82 = vpack.c.bf16 %v66, %v65
    %v83 = vld [vmem:[%s1] sm:$0xff]
    %v84 = vld [vmem:[%s1 + $0x8] sm:$0xff]
    %v85 = vld [vmem:[%s1 + $0x10] sm:$0xff]
    %v86 = vld [vmem:[%s1 + $0x18] sm:$0x33]
    %v87 = vpack.c.bf16 %v45, %v44
    %v88 = vpack.c.bf16 %v47, %v46
    %v89 = vpack.c.bf16 %v49, %v48
    %v90 = vpack.c.bf16 %v51, %v50
    %v91 = vpack.c.bf16 %v53, %v52
    %v92 = vpack.c.bf16 %v55, %v54
    %v93 = vpack.c.bf16 %v57, %v56
    %v94 = vpack.c.bf16 %v59, %v58
    %v95 = vpack.c.bf16 %v61, %v60
    %v96 = vpack.c.bf16 %v63, %v62
    %v97 = vpack.c.bf16 %v65, %v64
    %v98 = vpack.c.bf16 %v67, %v66
    %s99 = scalar_lea.vmem %s1, 32
    %v100 = vld [vmem:[%s99] sm:$0xff]
    %v101 = vld [vmem:[%s99 + $0x8] sm:$0xff]
    %v102 = vld [vmem:[%s99 + $0x10] sm:$0xff]
    %v103 = vld [vmem:[%s99 + $0x18] sm:$0x33]
    %v108 = vunpack.c.l.b16 %v100
    %v109 = vunpack.c.h.b16 %v100
    %v110 = vunpack.c.l.b16 %v101
    %v111 = vunpack.c.h.b16 %v101
    %v112 = vunpack.c.l.b16 %v102
    %v113 = vunpack.c.h.b16 %v102
    %v114 = vunpack.c.l.b16 %v103
    %v115 = vunpack.c.h.b16 %v103
    %v116 = vpack.c.b16 %v110, %v108
    %v117 = vpack.c.b16 %v111, %v109
    %v118 = vpack.c.b16 %v114, %v112
    %v119 = vpack.c.b16 %v115, %v113
    %vm122 = vcmask 228352
    %v124 = vsel %vm122, %v87, 0
    %v127 = vsel %vm122, %v88, 0
    %v130 = vsel %vm122, %v89, 0
    %v133 = vsel %vm122, %v90, 0
    %v136 = vsel %vm122, %v91, 0
    %v139 = vsel %vm122, %v92, 0
    %v142 = vsel %vm122, %v93, 0
    %v145 = vsel %vm122, %v94, 0
    %v148 = vsel %vm122, %v95, 0
    %v151 = vsel %vm122, %v96, 0
    %v154 = vsel %vm122, %v97, 0
    %v157 = vsel %vm122, %v98, 0
    %vm159 = vcmask 1045504
    %v161 = vsel %vm159, %v118, 0
    %v164 = vsel %vm159, %v119, 0
    %166 = vmatpush.bf16.msra.mxu0 0
    %167 = vmatpush.bf16.msra.mxu0 0
    %168 = vmatpush.bf16.msra.mxu0 0
    %169 = vmatpush.bf16.msra.mxu0 0
    %170 = vmatpush.bf16.msra.mxu0 0
    %171 = vmatpush.bf16.msra.mxu0 0
    %172 = vmatpush.bf16.msra.mxu0 %v161
    %173 = vmatpush.bf16.msra.mxu0 %v116
    %174 = vmatmul.bf16.gmra.mxu0 %v124
    %v175 = vpop.f32.mrf.mxu0
    %v176 = vadd.f32 0.0, %v175
    %v177 = vpop.f32.mrf.mxu0
    %v178 = vadd.f32 0.0, %v177
    %179 = vmatmul.bf16.gmra.mxu0 %v127
    %v180 = vpop.f32.mrf.mxu0
    %v181 = vadd.f32 0.0, %v180
    %v182 = vpop.f32.mrf.mxu0
    %v183 = vadd.f32 0.0, %v182
    %184 = vmatmul.bf16.gmra.mxu0 %v130
    %v185 = vpop.f32.mrf.mxu0
    %v186 = vadd.f32 0.0, %v185
    %v187 = vpop.f32.mrf.mxu0
    %v188 = vadd.f32 0.0, %v187
    %189 = vmatmul.bf16.gmra.mxu0 %v133
    %v190 = vpop.f32.mrf.mxu0
    %v191 = vadd.f32 0.0, %v190
    %v192 = vpop.f32.mrf.mxu0
    %v193 = vadd.f32 0.0, %v192
    %194 = vmatmul.bf16.gmra.mxu0 %v136
    %v195 = vpop.f32.mrf.mxu0
    %v196 = vadd.f32 0.0, %v195
    %v197 = vpop.f32.mrf.mxu0
    %v198 = vadd.f32 0.0, %v197
    %199 = vmatmul.bf16.gmra.mxu0 %v139
    %v200 = vpop.f32.mrf.mxu0
    %v201 = vadd.f32 0.0, %v200
    %v202 = vpop.f32.mrf.mxu0
    %v203 = vadd.f32 0.0, %v202
    %204 = vmatmul.bf16.gmra.mxu0 %v142
    %v205 = vpop.f32.mrf.mxu0
    %v206 = vadd.f32 0.0, %v205
    %v207 = vpop.f32.mrf.mxu0
    %v208 = vadd.f32 0.0, %v207
    %209 = vmatmul.bf16.gmra.mxu0 %v145
    %v210 = vpop.f32.mrf.mxu0
    %v211 = vadd.f32 0.0, %v210
    %v212 = vpop.f32.mrf.mxu0
    %v213 = vadd.f32 0.0, %v212
    %214 = vmatmul.bf16.gmra.mxu0 %v148
    %v215 = vpop.f32.mrf.mxu0
    %v216 = vadd.f32 0.0, %v215
    %v217 = vpop.f32.mrf.mxu0
    %v218 = vadd.f32 0.0, %v217
    %219 = vmatmul.bf16.gmra.mxu0 %v151
    %v220 = vpop.f32.mrf.mxu0
    %v221 = vadd.f32 0.0, %v220
    %v222 = vpop.f32.mrf.mxu0
    %v223 = vadd.f32 0.0, %v222
    %224 = vmatmul.bf16.gmra.mxu0 %v154
    %v225 = vpop.f32.mrf.mxu0
    %v226 = vadd.f32 0.0, %v225
    %v227 = vpop.f32.mrf.mxu0
    %v228 = vadd.f32 0.0, %v227
    %229 = vmatmul.bf16.gmra.mxu0 %v157
    %v230 = vpop.f32.mrf.mxu0
    %v231 = vadd.f32 0.0, %v230
    %v232 = vpop.f32.mrf.mxu0
    %v233 = vadd.f32 0.0, %v232
    %234 = vdwg.mxu0
    %235 = vmatpush.bf16.msra.mxu0 0
    %236 = vmatpush.bf16.msra.mxu0 0
    %237 = vmatpush.bf16.msra.mxu0 0
    %238 = vmatpush.bf16.msra.mxu0 0
    %239 = vmatpush.bf16.msra.mxu0 0
    %240 = vmatpush.bf16.msra.mxu0 0
    %241 = vmatpush.bf16.msra.mxu0 %v164
    %242 = vmatpush.bf16.msra.mxu0 %v117
    %243 = vmatmul.bf16.gmra.mxu0 %v124
    %v244 = vpop.f32.mrf.mxu0
    %v245 = vadd.f32 0.0, %v244
    %v246 = vpop.f32.mrf.mxu0
    %v247 = vadd.f32 0.0, %v246
    %248 = vmatmul.bf16.gmra.mxu0 %v127
    %v249 = vpop.f32.mrf.mxu0
    %v250 = vadd.f32 0.0, %v249
    %v251 = vpop.f32.mrf.mxu0
    %v252 = vadd.f32 0.0, %v251
    %253 = vmatmul.bf16.gmra.mxu0 %v130
    %v254 = vpop.f32.mrf.mxu0
    %v255 = vadd.f32 0.0, %v254
    %v256 = vpop.f32.mrf.mxu0
    %v257 = vadd.f32 0.0, %v256
    %258 = vmatmul.bf16.gmra.mxu0 %v133
    %v259 = vpop.f32.mrf.mxu0
    %v260 = vadd.f32 0.0, %v259
    %v261 = vpop.f32.mrf.mxu0
    %v262 = vadd.f32 0.0, %v261
    %263 = vmatmul.bf16.gmra.mxu0 %v136
    %v264 = vpop.f32.mrf.mxu0
    %v265 = vadd.f32 0.0, %v264
    %v266 = vpop.f32.mrf.mxu0
    %v267 = vadd.f32 0.0, %v266
    %268 = vmatmul.bf16.gmra.mxu0 %v139
    %v269 = vpop.f32.mrf.mxu0
    %v270 = vadd.f32 0.0, %v269
    %v271 = vpop.f32.mrf.mxu0
    %v272 = vadd.f32 0.0, %v271
    %273 = vmatmul.bf16.gmra.mxu0 %v142
    %v274 = vpop.f32.mrf.mxu0
    %v275 = vadd.f32 0.0, %v274
    %v276 = vpop.f32.mrf.mxu0
    %v277 = vadd.f32 0.0, %v276
    %278 = vmatmul.bf16.gmra.mxu0 %v145
    %v279 = vpop.f32.mrf.mxu0
    %v280 = vadd.f32 0.0, %v279
    %v281 = vpop.f32.mrf.mxu0
    %v282 = vadd.f32 0.0, %v281
    %283 = vmatmul.bf16.gmra.mxu0 %v148
    %v284 = vpop.f32.mrf.mxu0
    %v285 = vadd.f32 0.0, %v284
    %v286 = vpop.f32.mrf.mxu0
    %v287 = vadd.f32 0.0, %v286
    %288 = vmatmul.bf16.gmra.mxu0 %v151
    %v289 = vpop.f32.mrf.mxu0
    %v290 = vadd.f32 0.0, %v289
    %v291 = vpop.f32.mrf.mxu0
    %v292 = vadd.f32 0.0, %v291
    %293 = vmatmul.bf16.gmra.mxu0 %v154
    %v294 = vpop.f32.mrf.mxu0
    %v295 = vadd.f32 0.0, %v294
    %v296 = vpop.f32.mrf.mxu0
    %v297 = vadd.f32 0.0, %v296
    %298 = vmatmul.bf16.gmra.mxu0 %v157
    %v299 = vpop.f32.mrf.mxu0
    %v300 = vadd.f32 0.0, %v299
    %v301 = vpop.f32.mrf.mxu0
    %v302 = vadd.f32 0.0, %v301
    %303 = vdwg.mxu0
    %v308 = vunpack.c.l.b16 %v83
    %v309 = vunpack.c.h.b16 %v83
    %v310 = vunpack.c.l.b16 %v84
    %v311 = vunpack.c.h.b16 %v84
    %v312 = vunpack.c.l.b16 %v85
    %v313 = vunpack.c.h.b16 %v85
    %v314 = vunpack.c.l.b16 %v86
    %v315 = vunpack.c.h.b16 %v86
    %v316 = vpack.c.b16 %v310, %v308
    %v317 = vpack.c.b16 %v311, %v309
    %v318 = vpack.c.b16 %v314, %v312
    %v319 = vpack.c.b16 %v315, %v313
    %v323 = vsel %vm122, %v71, 0
    %v326 = vsel %vm122, %v72, 0
    %v329 = vsel %vm122, %v73, 0
    %v332 = vsel %vm122, %v74, 0
    %v335 = vsel %vm122, %v75, 0
    %v338 = vsel %vm122, %v76, 0
    %v341 = vsel %vm122, %v77, 0
    %v344 = vsel %vm122, %v78, 0
    %v347 = vsel %vm122, %v79, 0
    %v350 = vsel %vm122, %v80, 0
    %v353 = vsel %vm122, %v81, 0
    %v356 = vsel %vm122, %v82, 0
    %v359 = vsel %vm159, %v318, 0
    %v362 = vsel %vm159, %v319, 0
    %364 = vmatpush.bf16.msra.mxu0 0
    %365 = vmatpush.bf16.msra.mxu0 0
    %366 = vmatpush.bf16.msra.mxu0 0
    %367 = vmatpush.bf16.msra.mxu0 0
    %368 = vmatpush.bf16.msra.mxu0 0
    %369 = vmatpush.bf16.msra.mxu0 0
    %370 = vmatpush.bf16.msra.mxu0 %v359
    %371 = vmatpush.bf16.msra.mxu0 %v316
    %372 = vmatmul.bf16.gmra.mxu0 %v323
    %v373 = vpop.f32.mrf.mxu0
    %v374 = vadd.f32 %v176, %v373
    %v375 = vpop.f32.mrf.mxu0
    %v376 = vadd.f32 %v178, %v375
    %377 = vmatmul.bf16.gmra.mxu0 %v326
    %v378 = vpop.f32.mrf.mxu0
    %v379 = vadd.f32 %v181, %v378
    %v380 = vpop.f32.mrf.mxu0
    %v381 = vadd.f32 %v183, %v380
    %382 = vmatmul.bf16.gmra.mxu0 %v329
    %v383 = vpop.f32.mrf.mxu0
    %v384 = vadd.f32 %v186, %v383
    %v385 = vpop.f32.mrf.mxu0
    %v386 = vadd.f32 %v188, %v385
    %387 = vmatmul.bf16.gmra.mxu0 %v332
    %v388 = vpop.f32.mrf.mxu0
    %v389 = vadd.f32 %v191, %v388
    %v390 = vpop.f32.mrf.mxu0
    %v391 = vadd.f32 %v193, %v390
    %392 = vmatmul.bf16.gmra.mxu0 %v335
    %v393 = vpop.f32.mrf.mxu0
    %v394 = vadd.f32 %v196, %v393
    %v395 = vpop.f32.mrf.mxu0
    %v396 = vadd.f32 %v198, %v395
    %397 = vmatmul.bf16.gmra.mxu0 %v338
    %v398 = vpop.f32.mrf.mxu0
    %v399 = vadd.f32 %v201, %v398
    %v400 = vpop.f32.mrf.mxu0
    %v401 = vadd.f32 %v203, %v400
    %402 = vmatmul.bf16.gmra.mxu0 %v341
    %v403 = vpop.f32.mrf.mxu0
    %v404 = vadd.f32 %v206, %v403
    %v405 = vpop.f32.mrf.mxu0
    %v406 = vadd.f32 %v208, %v405
    %407 = vmatmul.bf16.gmra.mxu0 %v344
    %v408 = vpop.f32.mrf.mxu0
    %v409 = vadd.f32 %v211, %v408
    %v410 = vpop.f32.mrf.mxu0
    %v411 = vadd.f32 %v213, %v410
    %412 = vmatmul.bf16.gmra.mxu0 %v347
    %v413 = vpop.f32.mrf.mxu0
    %v414 = vadd.f32 %v216, %v413
    %v415 = vpop.f32.mrf.mxu0
    %v416 = vadd.f32 %v218, %v415
    %417 = vmatmul.bf16.gmra.mxu0 %v350
    %v418 = vpop.f32.mrf.mxu0
    %v419 = vadd.f32 %v221, %v418
    %v420 = vpop.f32.mrf.mxu0
    %v421 = vadd.f32 %v223, %v420
    %422 = vmatmul.bf16.gmra.mxu0 %v353
    %v423 = vpop.f32.mrf.mxu0
    %v424 = vadd.f32 %v226, %v423
    %v425 = vpop.f32.mrf.mxu0
    %v426 = vadd.f32 %v228, %v425
    %427 = vmatmul.bf16.gmra.mxu0 %v356
    %v428 = vpop.f32.mrf.mxu0
    %v429 = vadd.f32 %v231, %v428
    %v430 = vpop.f32.mrf.mxu0
    %v431 = vadd.f32 %v233, %v430
    %432 = vdwg.mxu0
    %433 = vmatpush.bf16.msra.mxu0 0
    %434 = vmatpush.bf16.msra.mxu0 0
    %435 = vmatpush.bf16.msra.mxu0 0
    %436 = vmatpush.bf16.msra.mxu0 0
    %437 = vmatpush.bf16.msra.mxu0 0
    %438 = vmatpush.bf16.msra.mxu0 0
    %439 = vmatpush.bf16.msra.mxu0 %v362
    %440 = vmatpush.bf16.msra.mxu0 %v317
    %441 = vmatmul.bf16.gmra.mxu0 %v323
    %v442 = vpop.f32.mrf.mxu0
    %v443 = vadd.f32 %v245, %v442
    %v444 = vpop.f32.mrf.mxu0
    %v445 = vadd.f32 %v247, %v444
    %446 = vmatmul.bf16.gmra.mxu0 %v326
    %v447 = vpop.f32.mrf.mxu0
    %v448 = vadd.f32 %v250, %v447
    %v449 = vpop.f32.mrf.mxu0
    %v450 = vadd.f32 %v252, %v449
    %451 = vmatmul.bf16.gmra.mxu0 %v329
    %v452 = vpop.f32.mrf.mxu0
    %v453 = vadd.f32 %v255, %v452
    %v454 = vpop.f32.mrf.mxu0
    %v455 = vadd.f32 %v257, %v454
    %456 = vmatmul.bf16.gmra.mxu0 %v332
    %v457 = vpop.f32.mrf.mxu0
    %v458 = vadd.f32 %v260, %v457
    %v459 = vpop.f32.mrf.mxu0
    %v460 = vadd.f32 %v262, %v459
    %461 = vmatmul.bf16.gmra.mxu0 %v335
    %v462 = vpop.f32.mrf.mxu0
    %v463 = vadd.f32 %v265, %v462
    %v464 = vpop.f32.mrf.mxu0
    %v465 = vadd.f32 %v267, %v464
    %466 = vmatmul.bf16.gmra.mxu0 %v338
    %v467 = vpop.f32.mrf.mxu0
    %v468 = vadd.f32 %v270, %v467
    %v469 = vpop.f32.mrf.mxu0
    %v470 = vadd.f32 %v272, %v469
    %471 = vmatmul.bf16.gmra.mxu0 %v341
    %v472 = vpop.f32.mrf.mxu0
    %v473 = vadd.f32 %v275, %v472
    %v474 = vpop.f32.mrf.mxu0
    %v475 = vadd.f32 %v277, %v474
    %476 = vmatmul.bf16.gmra.mxu0 %v344
    %v477 = vpop.f32.mrf.mxu0
    %v478 = vadd.f32 %v280, %v477
    %v479 = vpop.f32.mrf.mxu0
    %v480 = vadd.f32 %v282, %v479
    %481 = vmatmul.bf16.gmra.mxu0 %v347
    %v482 = vpop.f32.mrf.mxu0
    %v483 = vadd.f32 %v285, %v482
    %v484 = vpop.f32.mrf.mxu0
    %v485 = vadd.f32 %v287, %v484
    %486 = vmatmul.bf16.gmra.mxu0 %v350
    %v487 = vpop.f32.mrf.mxu0
    %v488 = vadd.f32 %v290, %v487
    %v489 = vpop.f32.mrf.mxu0
    %v490 = vadd.f32 %v292, %v489
    %491 = vmatmul.bf16.gmra.mxu0 %v353
    %v492 = vpop.f32.mrf.mxu0
    %v493 = vadd.f32 %v295, %v492
    %v494 = vpop.f32.mrf.mxu0
    %v495 = vadd.f32 %v297, %v494
    %496 = vmatmul.bf16.gmra.mxu0 %v356
    %v497 = vpop.f32.mrf.mxu0
    %v498 = vadd.f32 %v300, %v497
    %v499 = vpop.f32.mrf.mxu0
    %v500 = vadd.f32 %v302, %v499
    %501 = vdwg.mxu0
    %v502 = vpack.c.bf16 %v68, %v67
    %s503 = scalar_lea.vmem %s1, 64
    %v504 = vld [vmem:[%s503] sm:$0xff]
    %v505 = vld [vmem:[%s503 + $0x8] sm:$0xff]
    %v506 = vld [vmem:[%s503 + $0x10] sm:$0xff]
    %v507 = vld [vmem:[%s503 + $0x18] sm:$0x33]
    %v512 = vunpack.c.l.b16 %v504
    %v513 = vunpack.c.h.b16 %v504
    %v514 = vunpack.c.l.b16 %v505
    %v515 = vunpack.c.h.b16 %v505
    %v516 = vunpack.c.l.b16 %v506
    %v517 = vunpack.c.h.b16 %v506
    %v518 = vunpack.c.l.b16 %v507
    %v519 = vunpack.c.h.b16 %v507
    %v520 = vpack.c.b16 %v514, %v512
    %v521 = vpack.c.b16 %v515, %v513
    %v522 = vpack.c.b16 %v518, %v516
    %v523 = vpack.c.b16 %v519, %v517
    %v527 = vsel %vm122, %v502, 0
    %v530 = vsel %vm159, %v522, 0
    %v533 = vsel %vm159, %v523, 0
    %535 = vmatpush.bf16.msra.mxu0 0
    %536 = vmatpush.bf16.msra.mxu0 0
    %537 = vmatpush.bf16.msra.mxu0 0
    %538 = vmatpush.bf16.msra.mxu0 0
    %539 = vmatpush.bf16.msra.mxu0 0
    %540 = vmatpush.bf16.msra.mxu0 0
    %541 = vmatpush.bf16.msra.mxu0 %v530
    %542 = vmatpush.bf16.msra.mxu0 %v520
    %543 = vmatmul.bf16.gmra.mxu0 %v326
    %v544 = vpop.f32.mrf.mxu0
    %v545 = vadd.f32 0.0, %v544
    %v546 = vpop.f32.mrf.mxu0
    %v547 = vadd.f32 0.0, %v546
    %548 = vmatmul.bf16.gmra.mxu0 %v329
    %v549 = vpop.f32.mrf.mxu0
    %v550 = vadd.f32 0.0, %v549
    %v551 = vpop.f32.mrf.mxu0
    %v552 = vadd.f32 0.0, %v551
    %553 = vmatmul.bf16.gmra.mxu0 %v332
    %v554 = vpop.f32.mrf.mxu0
    %v555 = vadd.f32 0.0, %v554
    %v556 = vpop.f32.mrf.mxu0
    %v557 = vadd.f32 0.0, %v556
    %558 = vmatmul.bf16.gmra.mxu0 %v335
    %v559 = vpop.f32.mrf.mxu0
    %v560 = vadd.f32 0.0, %v559
    %v561 = vpop.f32.mrf.mxu0
    %v562 = vadd.f32 0.0, %v561
    %563 = vmatmul.bf16.gmra.mxu0 %v338
    %v564 = vpop.f32.mrf.mxu0
    %v565 = vadd.f32 0.0, %v564
    %v566 = vpop.f32.mrf.mxu0
    %v567 = vadd.f32 0.0, %v566
    %568 = vmatmul.bf16.gmra.mxu0 %v341
    %v569 = vpop.f32.mrf.mxu0
    %v570 = vadd.f32 0.0, %v569
    %v571 = vpop.f32.mrf.mxu0
    %v572 = vadd.f32 0.0, %v571
    %573 = vmatmul.bf16.gmra.mxu0 %v344
    %v574 = vpop.f32.mrf.mxu0
    %v575 = vadd.f32 0.0, %v574
    %v576 = vpop.f32.mrf.mxu0
    %v577 = vadd.f32 0.0, %v576
    %578 = vmatmul.bf16.gmra.mxu0 %v347
    %v579 = vpop.f32.mrf.mxu0
    %v580 = vadd.f32 0.0, %v579
    %v581 = vpop.f32.mrf.mxu0
    %v582 = vadd.f32 0.0, %v581
    %583 = vmatmul.bf16.gmra.mxu0 %v350
    %v584 = vpop.f32.mrf.mxu0
    %v585 = vadd.f32 0.0, %v584
    %v586 = vpop.f32.mrf.mxu0
    %v587 = vadd.f32 0.0, %v586
    %588 = vmatmul.bf16.gmra.mxu0 %v353
    %v589 = vpop.f32.mrf.mxu0
    %v590 = vadd.f32 0.0, %v589
    %v591 = vpop.f32.mrf.mxu0
    %v592 = vadd.f32 0.0, %v591
    %593 = vmatmul.bf16.gmra.mxu0 %v356
    %v594 = vpop.f32.mrf.mxu0
    %v595 = vadd.f32 0.0, %v594
    %v596 = vpop.f32.mrf.mxu0
    %v597 = vadd.f32 0.0, %v596
    %598 = vmatmul.bf16.gmra.mxu0 %v527
    %v599 = vpop.f32.mrf.mxu0
    %v600 = vadd.f32 0.0, %v599
    %v601 = vpop.f32.mrf.mxu0
    %v602 = vadd.f32 0.0, %v601
    %603 = vdwg.mxu0
    %604 = vmatpush.bf16.msra.mxu0 0
    %605 = vmatpush.bf16.msra.mxu0 0
    %606 = vmatpush.bf16.msra.mxu0 0
    %607 = vmatpush.bf16.msra.mxu0 0
    %608 = vmatpush.bf16.msra.mxu0 0
    %609 = vmatpush.bf16.msra.mxu0 0
    %610 = vmatpush.bf16.msra.mxu0 %v533
    %611 = vmatpush.bf16.msra.mxu0 %v521
    %612 = vmatmul.bf16.gmra.mxu0 %v326
    %v613 = vpop.f32.mrf.mxu0
    %v614 = vadd.f32 0.0, %v613
    %v615 = vpop.f32.mrf.mxu0
    %v616 = vadd.f32 0.0, %v615
    %617 = vmatmul.bf16.gmra.mxu0 %v329
    %v618 = vpop.f32.mrf.mxu0
    %v619 = vadd.f32 0.0, %v618
    %v620 = vpop.f32.mrf.mxu0
    %v621 = vadd.f32 0.0, %v620
    %622 = vmatmul.bf16.gmra.mxu0 %v332
    %v623 = vpop.f32.mrf.mxu0
    %v624 = vadd.f32 0.0, %v623
    %v625 = vpop.f32.mrf.mxu0
    %v626 = vadd.f32 0.0, %v625
    %627 = vmatmul.bf16.gmra.mxu0 %v335
    %v628 = vpop.f32.mrf.mxu0
    %v629 = vadd.f32 0.0, %v628
    %v630 = vpop.f32.mrf.mxu0
    %v631 = vadd.f32 0.0, %v630
    %632 = vmatmul.bf16.gmra.mxu0 %v338
    %v633 = vpop.f32.mrf.mxu0
    %v634 = vadd.f32 0.0, %v633
    %v635 = vpop.f32.mrf.mxu0
    %v636 = vadd.f32 0.0, %v635
    %637 = vmatmul.bf16.gmra.mxu0 %v341
    %v638 = vpop.f32.mrf.mxu0
    %v639 = vadd.f32 0.0, %v638
    %v640 = vpop.f32.mrf.mxu0
    %v641 = vadd.f32 0.0, %v640
    %642 = vmatmul.bf16.gmra.mxu0 %v344
    %v643 = vpop.f32.mrf.mxu0
    %v644 = vadd.f32 0.0, %v643
    %v645 = vpop.f32.mrf.mxu0
    %v646 = vadd.f32 0.0, %v645
    %647 = vmatmul.bf16.gmra.mxu0 %v347
    %v648 = vpop.f32.mrf.mxu0
    %v649 = vadd.f32 0.0, %v648
    %v650 = vpop.f32.mrf.mxu0
    %v651 = vadd.f32 0.0, %v650
    %652 = vmatmul.bf16.gmra.mxu0 %v350
    %v653 = vpop.f32.mrf.mxu0
    %v654 = vadd.f32 0.0, %v653
    %v655 = vpop.f32.mrf.mxu0
    %v656 = vadd.f32 0.0, %v655
    %657 = vmatmul.bf16.gmra.mxu0 %v353
    %v658 = vpop.f32.mrf.mxu0
    %v659 = vadd.f32 0.0, %v658
    %v660 = vpop.f32.mrf.mxu0
    %v661 = vadd.f32 0.0, %v660
    %662 = vmatmul.bf16.gmra.mxu0 %v356
    %v663 = vpop.f32.mrf.mxu0
    %v664 = vadd.f32 0.0, %v663
    %v665 = vpop.f32.mrf.mxu0
    %v666 = vadd.f32 0.0, %v665
    %667 = vmatmul.bf16.gmra.mxu0 %v527
    %v668 = vpop.f32.mrf.mxu0
    %v669 = vadd.f32 0.0, %v668
    %v670 = vpop.f32.mrf.mxu0
    %v671 = vadd.f32 0.0, %v670
    %672 = vdwg.mxu0
    %v673 = vadd.f32 %v374, %v545
    %v674 = vadd.f32 %v443, %v614
    %v675 = vadd.f32 %v376, %v547
    %v676 = vadd.f32 %v445, %v616
    %v677 = vadd.f32 %v379, %v550
    %v678 = vadd.f32 %v448, %v619
    %v679 = vadd.f32 %v381, %v552
    %v680 = vadd.f32 %v450, %v621
    %v681 = vadd.f32 %v384, %v555
    %v682 = vadd.f32 %v453, %v624
    %v683 = vadd.f32 %v386, %v557
    %v684 = vadd.f32 %v455, %v626
    %v685 = vadd.f32 %v389, %v560
    %v686 = vadd.f32 %v458, %v629
    %v687 = vadd.f32 %v391, %v562
    %v688 = vadd.f32 %v460, %v631
    %v689 = vadd.f32 %v394, %v565
    %v690 = vadd.f32 %v463, %v634
    %v691 = vadd.f32 %v396, %v567
    %v692 = vadd.f32 %v465, %v636
    %v693 = vadd.f32 %v399, %v570
    %v694 = vadd.f32 %v468, %v639
    %v695 = vadd.f32 %v401, %v572
    %v696 = vadd.f32 %v470, %v641
    %v697 = vadd.f32 %v404, %v575
    %v698 = vadd.f32 %v473, %v644
    %v699 = vadd.f32 %v406, %v577
    %v700 = vadd.f32 %v475, %v646
    %v701 = vadd.f32 %v409, %v580
    %v702 = vadd.f32 %v478, %v649
    %v703 = vadd.f32 %v411, %v582
    %v704 = vadd.f32 %v480, %v651
    %v705 = vadd.f32 %v414, %v585
    %v706 = vadd.f32 %v483, %v654
    %v707 = vadd.f32 %v416, %v587
    %v708 = vadd.f32 %v485, %v656
    %v709 = vadd.f32 %v419, %v590
    %v710 = vadd.f32 %v488, %v659
    %v711 = vadd.f32 %v421, %v592
    %v712 = vadd.f32 %v490, %v661
    %v713 = vadd.f32 %v424, %v595
    %v714 = vadd.f32 %v493, %v664
    %v715 = vadd.f32 %v426, %v597
    %v716 = vadd.f32 %v495, %v666
    %v717 = vadd.f32 %v429, %v600
    %v718 = vadd.f32 %v498, %v669
    %v719 = vadd.f32 %v431, %v602
    %v720 = vadd.f32 %v500, %v671
    %v721 = vpack.c.bf16 %v69, %v68
    %s722 = scalar_lea.vmem %s1, 96
    %v723 = vld [vmem:[%s722] sm:$0xff]
    %v724 = vld [vmem:[%s722 + $0x8] sm:$0xff]
    %v725 = vld [vmem:[%s722 + $0x10] sm:$0xff]
    %v726 = vld [vmem:[%s722 + $0x18] sm:$0x33]
    %v731 = vunpack.c.l.b16 %v723
    %v732 = vunpack.c.h.b16 %v723
    %v733 = vunpack.c.l.b16 %v724
    %v734 = vunpack.c.h.b16 %v724
    %v735 = vunpack.c.l.b16 %v725
    %v736 = vunpack.c.h.b16 %v725
    %v737 = vunpack.c.l.b16 %v726
    %v738 = vunpack.c.h.b16 %v726
    %v739 = vpack.c.b16 %v733, %v731
    %v740 = vpack.c.b16 %v734, %v732
    %v741 = vpack.c.b16 %v737, %v735
    %v742 = vpack.c.b16 %v738, %v736
    %v746 = vsel %vm122, %v721, 0
    %v749 = vsel %vm159, %v741, 0
    %v752 = vsel %vm159, %v742, 0
    %754 = vmatpush.bf16.msra.mxu0 0
    %755 = vmatpush.bf16.msra.mxu0 0
    %756 = vmatpush.bf16.msra.mxu0 0
    %757 = vmatpush.bf16.msra.mxu0 0
    %758 = vmatpush.bf16.msra.mxu0 0
    %759 = vmatpush.bf16.msra.mxu0 0
    %760 = vmatpush.bf16.msra.mxu0 %v749
    %761 = vmatpush.bf16.msra.mxu0 %v739
    %762 = vmatmul.bf16.gmra.mxu0 %v127
    %v763 = vpop.f32.mrf.mxu0
    %v764 = vadd.f32 0.0, %v763
    %v765 = vpop.f32.mrf.mxu0
    %v766 = vadd.f32 0.0, %v765
    %767 = vmatmul.bf16.gmra.mxu0 %v130
    %v768 = vpop.f32.mrf.mxu0
    %v769 = vadd.f32 0.0, %v768
    %v770 = vpop.f32.mrf.mxu0
    %v771 = vadd.f32 0.0, %v770
    %772 = vmatmul.bf16.gmra.mxu0 %v133
    %v773 = vpop.f32.mrf.mxu0
    %v774 = vadd.f32 0.0, %v773
    %v775 = vpop.f32.mrf.mxu0
    %v776 = vadd.f32 0.0, %v775
    %777 = vmatmul.bf16.gmra.mxu0 %v136
    %v778 = vpop.f32.mrf.mxu0
    %v779 = vadd.f32 0.0, %v778
    %v780 = vpop.f32.mrf.mxu0
    %v781 = vadd.f32 0.0, %v780
    %782 = vmatmul.bf16.gmra.mxu0 %v139
    %v783 = vpop.f32.mrf.mxu0
    %v784 = vadd.f32 0.0, %v783
    %v785 = vpop.f32.mrf.mxu0
    %v786 = vadd.f32 0.0, %v785
    %787 = vmatmul.bf16.gmra.mxu0 %v142
    %v788 = vpop.f32.mrf.mxu0
    %v789 = vadd.f32 0.0, %v788
    %v790 = vpop.f32.mrf.mxu0
    %v791 = vadd.f32 0.0, %v790
    %792 = vmatmul.bf16.gmra.mxu0 %v145
    %v793 = vpop.f32.mrf.mxu0
    %v794 = vadd.f32 0.0, %v793
    %v795 = vpop.f32.mrf.mxu0
    %v796 = vadd.f32 0.0, %v795
    %797 = vmatmul.bf16.gmra.mxu0 %v148
    %v798 = vpop.f32.mrf.mxu0
    %v799 = vadd.f32 0.0, %v798
    %v800 = vpop.f32.mrf.mxu0
    %v801 = vadd.f32 0.0, %v800
    %802 = vmatmul.bf16.gmra.mxu0 %v151
    %v803 = vpop.f32.mrf.mxu0
    %v804 = vadd.f32 0.0, %v803
    %v805 = vpop.f32.mrf.mxu0
    %v806 = vadd.f32 0.0, %v805
    %807 = vmatmul.bf16.gmra.mxu0 %v154
    %v808 = vpop.f32.mrf.mxu0
    %v809 = vadd.f32 0.0, %v808
    %v810 = vpop.f32.mrf.mxu0
    %v811 = vadd.f32 0.0, %v810
    %812 = vmatmul.bf16.gmra.mxu0 %v157
    %v813 = vpop.f32.mrf.mxu0
    %v814 = vadd.f32 0.0, %v813
    %v815 = vpop.f32.mrf.mxu0
    %v816 = vadd.f32 0.0, %v815
    %817 = vmatmul.bf16.gmra.mxu0 %v746
    %v818 = vpop.f32.mrf.mxu0
    %v819 = vadd.f32 0.0, %v818
    %v820 = vpop.f32.mrf.mxu0
    %v821 = vadd.f32 0.0, %v820
    %822 = vdwg.mxu0
    %823 = vmatpush.bf16.msra.mxu0 0
    %824 = vmatpush.bf16.msra.mxu0 0
    %825 = vmatpush.bf16.msra.mxu0 0
    %826 = vmatpush.bf16.msra.mxu0 0
    %827 = vmatpush.bf16.msra.mxu0 0
    %828 = vmatpush.bf16.msra.mxu0 0
    %829 = vmatpush.bf16.msra.mxu0 %v752
    %830 = vmatpush.bf16.msra.mxu0 %v740
    %831 = vmatmul.bf16.gmra.mxu0 %v127
    %v832 = vpop.f32.mrf.mxu0
    %v833 = vadd.f32 0.0, %v832
    %v834 = vpop.f32.mrf.mxu0
    %v835 = vadd.f32 0.0, %v834
    %836 = vmatmul.bf16.gmra.mxu0 %v130
    %v837 = vpop.f32.mrf.mxu0
    %v838 = vadd.f32 0.0, %v837
    %v839 = vpop.f32.mrf.mxu0
    %v840 = vadd.f32 0.0, %v839
    %841 = vmatmul.bf16.gmra.mxu0 %v133
    %v842 = vpop.f32.mrf.mxu0
    %v843 = vadd.f32 0.0, %v842
    %v844 = vpop.f32.mrf.mxu0
    %v845 = vadd.f32 0.0, %v844
    %846 = vmatmul.bf16.gmra.mxu0 %v136
    %v847 = vpop.f32.mrf.mxu0
    %v848 = vadd.f32 0.0, %v847
    %v849 = vpop.f32.mrf.mxu0
    %v850 = vadd.f32 0.0, %v849
    %851 = vmatmul.bf16.gmra.mxu0 %v139
    %v852 = vpop.f32.mrf.mxu0
    %v853 = vadd.f32 0.0, %v852
    %v854 = vpop.f32.mrf.mxu0
    %v855 = vadd.f32 0.0, %v854
    %856 = vmatmul.bf16.gmra.mxu0 %v142
    %v857 = vpop.f32.mrf.mxu0
    %v858 = vadd.f32 0.0, %v857
    %v859 = vpop.f32.mrf.mxu0
    %v860 = vadd.f32 0.0, %v859
    %861 = vmatmul.bf16.gmra.mxu0 %v145
    %v862 = vpop.f32.mrf.mxu0
    %v863 = vadd.f32 0.0, %v862
    %v864 = vpop.f32.mrf.mxu0
    %v865 = vadd.f32 0.0, %v864
    %866 = vmatmul.bf16.gmra.mxu0 %v148
    %v867 = vpop.f32.mrf.mxu0
    %v868 = vadd.f32 0.0, %v867
    %v869 = vpop.f32.mrf.mxu0
    %v870 = vadd.f32 0.0, %v869
    %871 = vmatmul.bf16.gmra.mxu0 %v151
    %v872 = vpop.f32.mrf.mxu0
    %v873 = vadd.f32 0.0, %v872
    %v874 = vpop.f32.mrf.mxu0
    %v875 = vadd.f32 0.0, %v874
    %876 = vmatmul.bf16.gmra.mxu0 %v154
    %v877 = vpop.f32.mrf.mxu0
    %v878 = vadd.f32 0.0, %v877
    %v879 = vpop.f32.mrf.mxu0
    %v880 = vadd.f32 0.0, %v879
    %881 = vmatmul.bf16.gmra.mxu0 %v157
    %v882 = vpop.f32.mrf.mxu0
    %v883 = vadd.f32 0.0, %v882
    %v884 = vpop.f32.mrf.mxu0
    %v885 = vadd.f32 0.0, %v884
    %886 = vmatmul.bf16.gmra.mxu0 %v746
    %v887 = vpop.f32.mrf.mxu0
    %v888 = vadd.f32 0.0, %v887
    %v889 = vpop.f32.mrf.mxu0
    %v890 = vadd.f32 0.0, %v889
    %891 = vdwg.mxu0
    %v892 = vadd.f32 %v673, %v764
    %v893 = vadd.f32 %v674, %v833
    %v894 = vadd.f32 %v675, %v766
    %v895 = vadd.f32 %v676, %v835
    %v896 = vadd.f32 %v677, %v769
    %v897 = vadd.f32 %v678, %v838
    %v898 = vadd.f32 %v679, %v771
    %v899 = vadd.f32 %v680, %v840
    %v900 = vadd.f32 %v681, %v774
    %v901 = vadd.f32 %v682, %v843
    %v902 = vadd.f32 %v683, %v776
    %v903 = vadd.f32 %v684, %v845
    %v904 = vadd.f32 %v685, %v779
    %v905 = vadd.f32 %v686, %v848
    %v906 = vadd.f32 %v687, %v781
    %v907 = vadd.f32 %v688, %v850
    %v908 = vadd.f32 %v689, %v784
    %v909 = vadd.f32 %v690, %v853
    %v910 = vadd.f32 %v691, %v786
    %v911 = vadd.f32 %v692, %v855
    %v912 = vadd.f32 %v693, %v789
    %v913 = vadd.f32 %v694, %v858
    %v914 = vadd.f32 %v695, %v791
    %v915 = vadd.f32 %v696, %v860
    %v916 = vadd.f32 %v697, %v794
    %v917 = vadd.f32 %v698, %v863
    %v918 = vadd.f32 %v699, %v796
    %v919 = vadd.f32 %v700, %v865
    %v920 = vadd.f32 %v701, %v799
    %v921 = vadd.f32 %v702, %v868
    %v922 = vadd.f32 %v703, %v801
    %v923 = vadd.f32 %v704, %v870
    %v924 = vadd.f32 %v705, %v804
    %v925 = vadd.f32 %v706, %v873
    %v926 = vadd.f32 %v707, %v806
    %v927 = vadd.f32 %v708, %v875
    %v928 = vadd.f32 %v709, %v809
    %v929 = vadd.f32 %v710, %v878
    %v930 = vadd.f32 %v711, %v811
    %v931 = vadd.f32 %v712, %v880
    %v932 = vadd.f32 %v713, %v814
    %v933 = vadd.f32 %v714, %v883
    %v934 = vadd.f32 %v715, %v816
    %v935 = vadd.f32 %v716, %v885
    %v936 = vadd.f32 %v717, %v819
    %v937 = vadd.f32 %v718, %v888
    %v938 = vadd.f32 %v719, %v821
    %v939 = vadd.f32 %v720, %v890
    %v940 = vpack.c.bf16 %v70, %v69
    %s941 = scalar_lea.vmem %s1, 128
    %v942 = vld [vmem:[%s941] sm:$0xff]
    %v943 = vld [vmem:[%s941 + $0x8] sm:$0xff]
    %v944 = vld [vmem:[%s941 + $0x10] sm:$0xff]
    %v945 = vld [vmem:[%s941 + $0x18] sm:$0x33]
    %v950 = vunpack.c.l.b16 %v942
    %v951 = vunpack.c.h.b16 %v942
    %v952 = vunpack.c.l.b16 %v943
    %v953 = vunpack.c.h.b16 %v943
    %v954 = vunpack.c.l.b16 %v944
    %v955 = vunpack.c.h.b16 %v944
    %v956 = vunpack.c.l.b16 %v945
    %v957 = vunpack.c.h.b16 %v945
    %v958 = vpack.c.b16 %v952, %v950
    %v959 = vpack.c.b16 %v953, %v951
    %v960 = vpack.c.b16 %v956, %v954
    %v961 = vpack.c.b16 %v957, %v955
    %v965 = vsel %vm122, %v940, 0
    %v968 = vsel %vm159, %v960, 0
    %v971 = vsel %vm159, %v961, 0
    %973 = vmatpush.bf16.msra.mxu0 0
    %974 = vmatpush.bf16.msra.mxu0 0
    %975 = vmatpush.bf16.msra.mxu0 0
    %976 = vmatpush.bf16.msra.mxu0 0
    %977 = vmatpush.bf16.msra.mxu0 0
    %978 = vmatpush.bf16.msra.mxu0 0
    %979 = vmatpush.bf16.msra.mxu0 %v968
    %980 = vmatpush.bf16.msra.mxu0 %v958
    %981 = vmatmul.bf16.gmra.mxu0 %v329
    %v982 = vpop.f32.mrf.mxu0
    %v983 = vadd.f32 0.0, %v982
    %v984 = vpop.f32.mrf.mxu0
    %v985 = vadd.f32 0.0, %v984
    %986 = vmatmul.bf16.gmra.mxu0 %v332
    %v987 = vpop.f32.mrf.mxu0
    %v988 = vadd.f32 0.0, %v987
    %v989 = vpop.f32.mrf.mxu0
    %v990 = vadd.f32 0.0, %v989
    %991 = vmatmul.bf16.gmra.mxu0 %v335
    %v992 = vpop.f32.mrf.mxu0
    %v993 = vadd.f32 0.0, %v992
    %v994 = vpop.f32.mrf.mxu0
    %v995 = vadd.f32 0.0, %v994
    %996 = vmatmul.bf16.gmra.mxu0 %v338
    %v997 = vpop.f32.mrf.mxu0
    %v998 = vadd.f32 0.0, %v997
    %v999 = vpop.f32.mrf.mxu0
    %v1000 = vadd.f32 0.0, %v999
    %1001 = vmatmul.bf16.gmra.mxu0 %v341
    %v1002 = vpop.f32.mrf.mxu0
    %v1003 = vadd.f32 0.0, %v1002
    %v1004 = vpop.f32.mrf.mxu0
    %v1005 = vadd.f32 0.0, %v1004
    %1006 = vmatmul.bf16.gmra.mxu0 %v344
    %v1007 = vpop.f32.mrf.mxu0
    %v1008 = vadd.f32 0.0, %v1007
    %v1009 = vpop.f32.mrf.mxu0
    %v1010 = vadd.f32 0.0, %v1009
    %1011 = vmatmul.bf16.gmra.mxu0 %v347
    %v1012 = vpop.f32.mrf.mxu0
    %v1013 = vadd.f32 0.0, %v1012
    %v1014 = vpop.f32.mrf.mxu0
    %v1015 = vadd.f32 0.0, %v1014
    %1016 = vmatmul.bf16.gmra.mxu0 %v350
    %v1017 = vpop.f32.mrf.mxu0
    %v1018 = vadd.f32 0.0, %v1017
    %v1019 = vpop.f32.mrf.mxu0
    %v1020 = vadd.f32 0.0, %v1019
    %1021 = vmatmul.bf16.gmra.mxu0 %v353
    %v1022 = vpop.f32.mrf.mxu0
    %v1023 = vadd.f32 0.0, %v1022
    %v1024 = vpop.f32.mrf.mxu0
    %v1025 = vadd.f32 0.0, %v1024
    %1026 = vmatmul.bf16.gmra.mxu0 %v356
    %v1027 = vpop.f32.mrf.mxu0
    %v1028 = vadd.f32 0.0, %v1027
    %v1029 = vpop.f32.mrf.mxu0
    %v1030 = vadd.f32 0.0, %v1029
    %1031 = vmatmul.bf16.gmra.mxu0 %v527
    %v1032 = vpop.f32.mrf.mxu0
    %v1033 = vadd.f32 0.0, %v1032
    %v1034 = vpop.f32.mrf.mxu0
    %v1035 = vadd.f32 0.0, %v1034
    %1036 = vmatmul.bf16.gmra.mxu0 %v965
    %v1037 = vpop.f32.mrf.mxu0
    %v1038 = vadd.f32 0.0, %v1037
    %v1039 = vpop.f32.mrf.mxu0
    %v1040 = vadd.f32 0.0, %v1039
    %1041 = vdwg.mxu0
    %1042 = vmatpush.bf16.msra.mxu0 0
    %1043 = vmatpush.bf16.msra.mxu0 0
    %1044 = vmatpush.bf16.msra.mxu0 0
    %1045 = vmatpush.bf16.msra.mxu0 0
    %1046 = vmatpush.bf16.msra.mxu0 0
    %1047 = vmatpush.bf16.msra.mxu0 0
    %1048 = vmatpush.bf16.msra.mxu0 %v971
    %1049 = vmatpush.bf16.msra.mxu0 %v959
    %1050 = vmatmul.bf16.gmra.mxu0 %v329
    %v1051 = vpop.f32.mrf.mxu0
    %v1052 = vadd.f32 0.0, %v1051
    %v1053 = vpop.f32.mrf.mxu0
    %v1054 = vadd.f32 0.0, %v1053
    %1055 = vmatmul.bf16.gmra.mxu0 %v332
    %v1056 = vpop.f32.mrf.mxu0
    %v1057 = vadd.f32 0.0, %v1056
    %v1058 = vpop.f32.mrf.mxu0
    %v1059 = vadd.f32 0.0, %v1058
    %1060 = vmatmul.bf16.gmra.mxu0 %v335
    %v1061 = vpop.f32.mrf.mxu0
    %v1062 = vadd.f32 0.0, %v1061
    %v1063 = vpop.f32.mrf.mxu0
    %v1064 = vadd.f32 0.0, %v1063
    %1065 = vmatmul.bf16.gmra.mxu0 %v338
    %v1066 = vpop.f32.mrf.mxu0
    %v1067 = vadd.f32 0.0, %v1066
    %v1068 = vpop.f32.mrf.mxu0
    %v1069 = vadd.f32 0.0, %v1068
    %1070 = vmatmul.bf16.gmra.mxu0 %v341
    %v1071 = vpop.f32.mrf.mxu0
    %v1072 = vadd.f32 0.0, %v1071
    %v1073 = vpop.f32.mrf.mxu0
    %v1074 = vadd.f32 0.0, %v1073
    %1075 = vmatmul.bf16.gmra.mxu0 %v344
    %v1076 = vpop.f32.mrf.mxu0
    %v1077 = vadd.f32 0.0, %v1076
    %v1078 = vpop.f32.mrf.mxu0
    %v1079 = vadd.f32 0.0, %v1078
    %1080 = vmatmul.bf16.gmra.mxu0 %v347
    %v1081 = vpop.f32.mrf.mxu0
    %v1082 = vadd.f32 0.0, %v1081
    %v1083 = vpop.f32.mrf.mxu0
    %v1084 = vadd.f32 0.0, %v1083
    %1085 = vmatmul.bf16.gmra.mxu0 %v350
    %v1086 = vpop.f32.mrf.mxu0
    %v1087 = vadd.f32 0.0, %v1086
    %v1088 = vpop.f32.mrf.mxu0
    %v1089 = vadd.f32 0.0, %v1088
    %1090 = vmatmul.bf16.gmra.mxu0 %v353
    %v1091 = vpop.f32.mrf.mxu0
    %v1092 = vadd.f32 0.0, %v1091
    %v1093 = vpop.f32.mrf.mxu0
    %v1094 = vadd.f32 0.0, %v1093
    %1095 = vmatmul.bf16.gmra.mxu0 %v356
    %v1096 = vpop.f32.mrf.mxu0
    %v1097 = vadd.f32 0.0, %v1096
    %v1098 = vpop.f32.mrf.mxu0
    %v1099 = vadd.f32 0.0, %v1098
    %1100 = vmatmul.bf16.gmra.mxu0 %v527
    %v1101 = vpop.f32.mrf.mxu0
    %v1102 = vadd.f32 0.0, %v1101
    %v1103 = vpop.f32.mrf.mxu0
    %v1104 = vadd.f32 0.0, %v1103
    %1105 = vmatmul.bf16.gmra.mxu0 %v965
    %v1106 = vpop.f32.mrf.mxu0
    %v1107 = vadd.f32 0.0, %v1106
    %v1108 = vpop.f32.mrf.mxu0
    %v1109 = vadd.f32 0.0, %v1108
    %1110 = vdwg.mxu0
    %v1111 = vadd.f32 %v892, %v983
    %v1112 = vadd.f32 %v893, %v1052
    %v1113 = vadd.f32 %v894, %v985
    %v1114 = vadd.f32 %v895, %v1054
    %v1115 = vadd.f32 %v896, %v988
    %v1116 = vadd.f32 %v897, %v1057
    %v1117 = vadd.f32 %v898, %v990
    %v1118 = vadd.f32 %v899, %v1059
    %v1119 = vadd.f32 %v900, %v993
    %v1120 = vadd.f32 %v901, %v1062
    %v1121 = vadd.f32 %v902, %v995
    %v1122 = vadd.f32 %v903, %v1064
    %v1123 = vadd.f32 %v904, %v998
    %v1124 = vadd.f32 %v905, %v1067
    %v1125 = vadd.f32 %v906, %v1000
    %v1126 = vadd.f32 %v907, %v1069
    %v1127 = vadd.f32 %v908, %v1003
    %v1128 = vadd.f32 %v909, %v1072
    %v1129 = vadd.f32 %v910, %v1005
    %v1130 = vadd.f32 %v911, %v1074
    %v1131 = vadd.f32 %v912, %v1008
    %v1132 = vadd.f32 %v913, %v1077
    %v1133 = vadd.f32 %v914, %v1010
    %v1134 = vadd.f32 %v915, %v1079
    %v1135 = vadd.f32 %v916, %v1013
    %v1136 = vadd.f32 %v917, %v1082
    %v1137 = vadd.f32 %v918, %v1015
    %v1138 = vadd.f32 %v919, %v1084
    %v1139 = vadd.f32 %v920, %v1018
    %v1140 = vadd.f32 %v921, %v1087
    %v1141 = vadd.f32 %v922, %v1020
    %v1142 = vadd.f32 %v923, %v1089
    %v1143 = vadd.f32 %v924, %v1023
    %v1144 = vadd.f32 %v925, %v1092
    %v1145 = vadd.f32 %v926, %v1025
    %v1146 = vadd.f32 %v927, %v1094
    %v1147 = vadd.f32 %v928, %v1028
    %v1148 = vadd.f32 %v929, %v1097
    %v1149 = vadd.f32 %v930, %v1030
    %v1150 = vadd.f32 %v931, %v1099
    %v1151 = vadd.f32 %v932, %v1033
    %v1152 = vadd.f32 %v933, %v1102
    %v1153 = vadd.f32 %v934, %v1035
    %v1154 = vadd.f32 %v935, %v1104
    %v1155 = vadd.f32 %v936, %v1038
    %v1156 = vadd.f32 %v937, %v1107
    %v1157 = vadd.f32 %v938, %v1040
    %v1158 = vadd.f32 %v939, %v1109
    %v1159 = vld [vmem:[%s2] sm:$0x3]
    %v1161 = vperm.slane %v1159, 0
    %v1162 = vperm.slane %v1159, 1
    %v1165 = vadd.f32 %v1111, %v1161
    %v1166 = vadd.f32 %v1112, %v1162
    %v1167 = vadd.f32 %v1113, %v1161
    %v1168 = vadd.f32 %v1114, %v1162
    %v1169 = vadd.f32 %v1115, %v1161
    %v1170 = vadd.f32 %v1116, %v1162
    %v1171 = vadd.f32 %v1117, %v1161
    %v1172 = vadd.f32 %v1118, %v1162
    %v1173 = vadd.f32 %v1119, %v1161
    %v1174 = vadd.f32 %v1120, %v1162
    %v1175 = vadd.f32 %v1121, %v1161
    %v1176 = vadd.f32 %v1122, %v1162
    %v1177 = vadd.f32 %v1123, %v1161
    %v1178 = vadd.f32 %v1124, %v1162
    %v1179 = vadd.f32 %v1125, %v1161
    %v1180 = vadd.f32 %v1126, %v1162
    %v1181 = vadd.f32 %v1127, %v1161
    %v1182 = vadd.f32 %v1128, %v1162
    %v1183 = vadd.f32 %v1129, %v1161
    %v1184 = vadd.f32 %v1130, %v1162
    %v1185 = vadd.f32 %v1131, %v1161
    %v1186 = vadd.f32 %v1132, %v1162
    %v1187 = vadd.f32 %v1133, %v1161
    %v1188 = vadd.f32 %v1134, %v1162
    %v1189 = vadd.f32 %v1135, %v1161
    %v1190 = vadd.f32 %v1136, %v1162
    %v1191 = vadd.f32 %v1137, %v1161
    %v1192 = vadd.f32 %v1138, %v1162
    %v1193 = vadd.f32 %v1139, %v1161
    %v1194 = vadd.f32 %v1140, %v1162
    %v1195 = vadd.f32 %v1141, %v1161
    %v1196 = vadd.f32 %v1142, %v1162
    %v1197 = vadd.f32 %v1143, %v1161
    %v1198 = vadd.f32 %v1144, %v1162
    %v1199 = vadd.f32 %v1145, %v1161
    %v1200 = vadd.f32 %v1146, %v1162
    %v1201 = vadd.f32 %v1147, %v1161
    %v1202 = vadd.f32 %v1148, %v1162
    %v1203 = vadd.f32 %v1149, %v1161
    %v1204 = vadd.f32 %v1150, %v1162
    %v1205 = vadd.f32 %v1151, %v1161
    %v1206 = vadd.f32 %v1152, %v1162
    %v1207 = vadd.f32 %v1153, %v1161
    %v1208 = vadd.f32 %v1154, %v1162
    %v1209 = vadd.f32 %v1155, %v1161
    %v1210 = vadd.f32 %v1156, %v1162
    %v1211 = vadd.f32 %v1157, %v1161
    %v1212 = vadd.f32 %v1158, %v1162
    %v1213 = vmax.f32 %v1165, %v1166
    %v1214 = vmax.f32 %v1167, %v1168
    %v1215 = vmax.f32 %v1169, %v1170
    %v1216 = vmax.f32 %v1171, %v1172
    %v1217 = vmax.f32 %v1173, %v1174
    %v1218 = vmax.f32 %v1175, %v1176
    %v1219 = vmax.f32 %v1177, %v1178
    %v1220 = vmax.f32 %v1179, %v1180
    %v1221 = vmax.f32 %v1181, %v1182
    %v1222 = vmax.f32 %v1183, %v1184
    %v1223 = vmax.f32 %v1185, %v1186
    %v1224 = vmax.f32 %v1187, %v1188
    %v1225 = vmax.f32 %v1189, %v1190
    %v1226 = vmax.f32 %v1191, %v1192
    %v1227 = vmax.f32 %v1193, %v1194
    %v1228 = vmax.f32 %v1195, %v1196
    %v1229 = vmax.f32 %v1197, %v1198
    %v1230 = vmax.f32 %v1199, %v1200
    %v1231 = vmax.f32 %v1201, %v1202
    %v1232 = vmax.f32 %v1203, %v1204
    %v1233 = vmax.f32 %v1205, %v1206
    %v1234 = vmax.f32 %v1207, %v1208
    %v1235 = vmax.f32 %v1209, %v1210
    %v1236 = vmax.f32 %v1211, %v1212
    %v1237 = vmax.f32 %v1213, 0.0
    %v1238 = vmax.f32 %v1214, 0.0
    %v1239 = vmax.f32 %v1215, 0.0
    %v1240 = vmax.f32 %v1216, 0.0
    %v1241 = vmax.f32 %v1217, 0.0
    %v1242 = vmax.f32 %v1218, 0.0
    %v1243 = vmax.f32 %v1219, 0.0
    %v1244 = vmax.f32 %v1220, 0.0
    %v1245 = vmax.f32 %v1221, 0.0
    %v1246 = vmax.f32 %v1222, 0.0
    %v1247 = vmax.f32 %v1223, 0.0
    %v1248 = vmax.f32 %v1224, 0.0
    %v1249 = vmax.f32 %v1225, 0.0
    %v1250 = vmax.f32 %v1226, 0.0
    %v1251 = vmax.f32 %v1227, 0.0
    %v1252 = vmax.f32 %v1228, 0.0
    %v1253 = vmax.f32 %v1229, 0.0
    %v1254 = vmax.f32 %v1230, 0.0
    %v1255 = vmax.f32 %v1231, 0.0
    %v1256 = vmax.f32 %v1232, 0.0
    %v1257 = vmax.f32 %v1233, 0.0
    %v1258 = vmax.f32 %v1234, 0.0
    %v1259 = vmax.f32 %v1235, 0.0
    %v1260 = vmax.f32 %v1236, 0.0
    %v1261 = vmax.f32 %v1237, %v1238
    %v1262 = vmax.f32 %v1239, %v1240
    %v1263 = vmax.f32 %v1241, %v1242
    %v1264 = vmax.f32 %v1243, %v1244
    %v1265 = vmax.f32 %v1245, %v1246
    %v1266 = vmax.f32 %v1247, %v1248
    %v1267 = vmax.f32 %v1249, %v1250
    %v1268 = vmax.f32 %v1251, %v1252
    %v1269 = vmax.f32 %v1253, %v1254
    %v1270 = vmax.f32 %v1255, %v1256
    %v1271 = vmax.f32 %v1257, %v1258
    %v1272 = vmax.f32 %v1259, %v1260
    %v1273 = vpack.c.bf16 %v1261, %v1261
    %v1274 = vld [vmem:[#allocation2] sm:$0xf]
    %v1275 = vld [vmem:[#allocation2 + $0x4] sm:$0xf]
    %v1276 = vld [vmem:[#allocation2 + $0x8] sm:$0xf]
    %v1277 = vld [vmem:[#allocation2 + $0xc] sm:$0xf]
    %v1278 = vld [vmem:[#allocation2 + $0x10] sm:$0xf]
    %v1279 = vld [vmem:[#allocation2 + $0x14] sm:$0xf]
    %v1280 = vld [vmem:[#allocation2 + $0x18] sm:$0xf]
    %v1281 = vld [vmem:[#allocation2 + $0x1c] sm:$0xf]
    %v1282 = vld [vmem:[#allocation2 + $0x20] sm:$0xf]
    %v1283 = vld [vmem:[#allocation2 + $0x24] sm:$0xf]
    %v1284 = vld [vmem:[#allocation2 + $0x28] sm:$0xf]
    %v1285 = vld [vmem:[#allocation2 + $0x2c] sm:$0xf]
    %v1286 = vld [vmem:[#allocation2 + $0x30] sm:$0xf]
    %v1287 = vld [vmem:[#allocation2 + $0x34] sm:$0xf]
    %v1288 = vld [vmem:[#allocation2 + $0x38] sm:$0xf]
    %v1289 = vld [vmem:[#allocation2 + $0x3c] sm:$0xf]
    %v1290 = vpack.c.bf16 %v1262, %v1262
    %s1291 = scalar_lea.vmem [#allocation2], 64
    %v1292 = vld [vmem:[%s1291] sm:$0xf]
    %v1293 = vld [vmem:[%s1291 + $0x4] sm:$0xf]
    %v1294 = vld [vmem:[%s1291 + $0x8] sm:$0xf]
    %v1295 = vld [vmem:[%s1291 + $0xc] sm:$0xf]
    %v1296 = vld [vmem:[%s1291 + $0x10] sm:$0xf]
    %v1297 = vld [vmem:[%s1291 + $0x14] sm:$0xf]
    %v1298 = vld [vmem:[%s1291 + $0x18] sm:$0xf]
    %v1299 = vld [vmem:[%s1291 + $0x1c] sm:$0xf]
    %v1300 = vld [vmem:[%s1291 + $0x20] sm:$0xf]
    %v1301 = vld [vmem:[%s1291 + $0x24] sm:$0xf]
    %v1302 = vld [vmem:[%s1291 + $0x28] sm:$0xf]
    %v1303 = vld [vmem:[%s1291 + $0x2c] sm:$0xf]
    %v1304 = vld [vmem:[%s1291 + $0x30] sm:$0xf]
    %v1305 = vld [vmem:[%s1291 + $0x34] sm:$0xf]
    %v1306 = vld [vmem:[%s1291 + $0x38] sm:$0xf]
    %v1307 = vld [vmem:[%s1291 + $0x3c] sm:$0xf]
    %v1324 = vunpack.c.l.b16 %v1292
    %v1325 = vunpack.c.l.b16 %v1293
    %v1326 = vunpack.c.l.b16 %v1294
    %v1327 = vunpack.c.l.b16 %v1295
    %v1328 = vunpack.c.l.b16 %v1296
    %v1329 = vunpack.c.l.b16 %v1297
    %v1330 = vunpack.c.l.b16 %v1298
    %v1331 = vunpack.c.l.b16 %v1299
    %v1332 = vunpack.c.l.b16 %v1300
    %v1333 = vunpack.c.l.b16 %v1301
    %v1334 = vunpack.c.l.b16 %v1302
    %v1335 = vunpack.c.l.b16 %v1303
    %v1336 = vunpack.c.l.b16 %v1304
    %v1337 = vunpack.c.l.b16 %v1305
    %v1338 = vunpack.c.l.b16 %v1306
    %v1339 = vunpack.c.l.b16 %v1307
    %v1340 = vpack.c.b16 %v1325, %v1324
    %v1341 = vpack.c.b16 %v1327, %v1326
    %v1342 = vpack.c.b16 %v1329, %v1328
    %v1343 = vpack.c.b16 %v1331, %v1330
    %v1344 = vpack.c.b16 %v1333, %v1332
    %v1345 = vpack.c.b16 %v1335, %v1334
    %v1346 = vpack.c.b16 %v1337, %v1336
    %v1347 = vpack.c.b16 %v1339, %v1338
    %1356 = vmatpush.bf16.msra.mxu0 %v1347
    %1357 = vmatpush.bf16.msra.mxu0 %v1346
    %1358 = vmatpush.bf16.msra.mxu0 %v1345
    %1359 = vmatpush.bf16.msra.mxu0 %v1344
    %1360 = vmatpush.bf16.msra.mxu0 %v1343
    %1361 = vmatpush.bf16.msra.mxu0 %v1342
    %1362 = vmatpush.bf16.msra.mxu0 %v1341
    %1363 = vmatpush.bf16.msra.mxu0 %v1340
    %1364 = vmatmul.bf16.gmra.mxu0 %v1290
    %v1365 = vpop.f32.mrf.mxu0
    %v1366 = vadd.f32 0.0, %v1365
    %v1367 = vpop.f32.mrf.mxu0
    %1368 = vdwg.mxu0
    %v1385 = vunpack.c.l.b16 %v1274
    %v1386 = vunpack.c.l.b16 %v1275
    %v1387 = vunpack.c.l.b16 %v1276
    %v1388 = vunpack.c.l.b16 %v1277
    %v1389 = vunpack.c.l.b16 %v1278
    %v1390 = vunpack.c.l.b16 %v1279
    %v1391 = vunpack.c.l.b16 %v1280
    %v1392 = vunpack.c.l.b16 %v1281
    %v1393 = vunpack.c.l.b16 %v1282
    %v1394 = vunpack.c.l.b16 %v1283
    %v1395 = vunpack.c.l.b16 %v1284
    %v1396 = vunpack.c.l.b16 %v1285
    %v1397 = vunpack.c.l.b16 %v1286
    %v1398 = vunpack.c.l.b16 %v1287
    %v1399 = vunpack.c.l.b16 %v1288
    %v1400 = vunpack.c.l.b16 %v1289
    %v1401 = vpack.c.b16 %v1386, %v1385
    %v1402 = vpack.c.b16 %v1388, %v1387
    %v1403 = vpack.c.b16 %v1390, %v1389
    %v1404 = vpack.c.b16 %v1392, %v1391
    %v1405 = vpack.c.b16 %v1394, %v1393
    %v1406 = vpack.c.b16 %v1396, %v1395
    %v1407 = vpack.c.b16 %v1398, %v1397
    %v1408 = vpack.c.b16 %v1400, %v1399
    %1417 = vmatpush.bf16.msra.mxu0 %v1408
    %1418 = vmatpush.bf16.msra.mxu0 %v1407
    %1419 = vmatpush.bf16.msra.mxu0 %v1406
    %1420 = vmatpush.bf16.msra.mxu0 %v1405
    %1421 = vmatpush.bf16.msra.mxu0 %v1404
    %1422 = vmatpush.bf16.msra.mxu0 %v1403
    %1423 = vmatpush.bf16.msra.mxu0 %v1402
    %1424 = vmatpush.bf16.msra.mxu0 %v1401
    %1425 = vmatmul.bf16.gmra.mxu0 %v1273
    %v1426 = vpop.f32.mrf.mxu0
    %v1427 = vadd.f32 %v1366, %v1426
    %v1428 = vpop.f32.mrf.mxu0
    %1429 = vdwg.mxu0
    %v1430 = vpack.c.bf16 %v1263, %v1263
    %s1431 = scalar_lea.vmem [#allocation2], 128
    %v1432 = vld [vmem:[%s1431] sm:$0xf]
    %v1433 = vld [vmem:[%s1431 + $0x4] sm:$0xf]
    %v1434 = vld [vmem:[%s1431 + $0x8] sm:$0xf]
    %v1435 = vld [vmem:[%s1431 + $0xc] sm:$0xf]
    %v1436 = vld [vmem:[%s1431 + $0x10] sm:$0xf]
    %v1437 = vld [vmem:[%s1431 + $0x14] sm:$0xf]
    %v1438 = vld [vmem:[%s1431 + $0x18] sm:$0xf]
    %v1439 = vld [vmem:[%s1431 + $0x1c] sm:$0xf]
    %v1440 = vld [vmem:[%s1431 + $0x20] sm:$0xf]
    %v1441 = vld [vmem:[%s1431 + $0x24] sm:$0xf]
    %v1442 = vld [vmem:[%s1431 + $0x28] sm:$0xf]
    %v1443 = vld [vmem:[%s1431 + $0x2c] sm:$0xf]
    %v1444 = vld [vmem:[%s1431 + $0x30] sm:$0xf]
    %v1445 = vld [vmem:[%s1431 + $0x34] sm:$0xf]
    %v1446 = vld [vmem:[%s1431 + $0x38] sm:$0xf]
    %v1447 = vld [vmem:[%s1431 + $0x3c] sm:$0xf]
    %v1464 = vunpack.c.l.b16 %v1432
    %v1465 = vunpack.c.l.b16 %v1433
    %v1466 = vunpack.c.l.b16 %v1434
    %v1467 = vunpack.c.l.b16 %v1435
    %v1468 = vunpack.c.l.b16 %v1436
    %v1469 = vunpack.c.l.b16 %v1437
    %v1470 = vunpack.c.l.b16 %v1438
    %v1471 = vunpack.c.l.b16 %v1439
    %v1472 = vunpack.c.l.b16 %v1440
    %v1473 = vunpack.c.l.b16 %v1441
    %v1474 = vunpack.c.l.b16 %v1442
    %v1475 = vunpack.c.l.b16 %v1443
    %v1476 = vunpack.c.l.b16 %v1444
    %v1477 = vunpack.c.l.b16 %v1445
    %v1478 = vunpack.c.l.b16 %v1446
    %v1479 = vunpack.c.l.b16 %v1447
    %v1480 = vpack.c.b16 %v1465, %v1464
    %v1481 = vpack.c.b16 %v1467, %v1466
    %v1482 = vpack.c.b16 %v1469, %v1468
    %v1483 = vpack.c.b16 %v1471, %v1470
    %v1484 = vpack.c.b16 %v1473, %v1472
    %v1485 = vpack.c.b16 %v1475, %v1474
    %v1486 = vpack.c.b16 %v1477, %v1476
    %v1487 = vpack.c.b16 %v1479, %v1478
    %1496 = vmatpush.bf16.msra.mxu0 %v1487
    %1497 = vmatpush.bf16.msra.mxu0 %v1486
    %1498 = vmatpush.bf16.msra.mxu0 %v1485
    %1499 = vmatpush.bf16.msra.mxu0 %v1484
    %1500 = vmatpush.bf16.msra.mxu0 %v1483
    %1501 = vmatpush.bf16.msra.mxu0 %v1482
    %1502 = vmatpush.bf16.msra.mxu0 %v1481
    %1503 = vmatpush.bf16.msra.mxu0 %v1480
    %1504 = vmatmul.bf16.gmra.mxu0 %v1430
    %v1505 = vpop.f32.mrf.mxu0
    %v1506 = vadd.f32 0.0, %v1505
    %v1507 = vpop.f32.mrf.mxu0
    %1508 = vdwg.mxu0
    %v1509 = vadd.f32 %v1427, %v1506
    %v1510 = vpack.c.bf16 %v1264, %v1264
    %s1511 = scalar_lea.vmem [#allocation2], 192
    %v1512 = vld [vmem:[%s1511] sm:$0xf]
    %v1513 = vld [vmem:[%s1511 + $0x4] sm:$0xf]
    %v1514 = vld [vmem:[%s1511 + $0x8] sm:$0xf]
    %v1515 = vld [vmem:[%s1511 + $0xc] sm:$0xf]
    %v1516 = vld [vmem:[%s1511 + $0x10] sm:$0xf]
    %v1517 = vld [vmem:[%s1511 + $0x14] sm:$0xf]
    %v1518 = vld [vmem:[%s1511 + $0x18] sm:$0xf]
    %v1519 = vld [vmem:[%s1511 + $0x1c] sm:$0xf]
    %v1520 = vld [vmem:[%s1511 + $0x20] sm:$0xf]
    %v1521 = vld [vmem:[%s1511 + $0x24] sm:$0xf]
    %v1522 = vld [vmem:[%s1511 + $0x28] sm:$0xf]
    %v1523 = vld [vmem:[%s1511 + $0x2c] sm:$0xf]
    %v1524 = vld [vmem:[%s1511 + $0x30] sm:$0xf]
    %v1525 = vld [vmem:[%s1511 + $0x34] sm:$0xf]
    %v1526 = vld [vmem:[%s1511 + $0x38] sm:$0xf]
    %v1527 = vld [vmem:[%s1511 + $0x3c] sm:$0xf]
    %v1544 = vunpack.c.l.b16 %v1512
    %v1545 = vunpack.c.l.b16 %v1513
    %v1546 = vunpack.c.l.b16 %v1514
    %v1547 = vunpack.c.l.b16 %v1515
    %v1548 = vunpack.c.l.b16 %v1516
    %v1549 = vunpack.c.l.b16 %v1517
    %v1550 = vunpack.c.l.b16 %v1518
    %v1551 = vunpack.c.l.b16 %v1519
    %v1552 = vunpack.c.l.b16 %v1520
    %v1553 = vunpack.c.l.b16 %v1521
    %v1554 = vunpack.c.l.b16 %v1522
    %v1555 = vunpack.c.l.b16 %v1523
    %v1556 = vunpack.c.l.b16 %v1524
    %v1557 = vunpack.c.l.b16 %v1525
    %v1558 = vunpack.c.l.b16 %v1526
    %v1559 = vunpack.c.l.b16 %v1527
    %v1560 = vpack.c.b16 %v1545, %v1544
    %v1561 = vpack.c.b16 %v1547, %v1546
    %v1562 = vpack.c.b16 %v1549, %v1548
    %v1563 = vpack.c.b16 %v1551, %v1550
    %v1564 = vpack.c.b16 %v1553, %v1552
    %v1565 = vpack.c.b16 %v1555, %v1554
    %v1566 = vpack.c.b16 %v1557, %v1556
    %v1567 = vpack.c.b16 %v1559, %v1558
    %1576 = vmatpush.bf16.msra.mxu0 %v1567
    %1577 = vmatpush.bf16.msra.mxu0 %v1566
    %1578 = vmatpush.bf16.msra.mxu0 %v1565
    %1579 = vmatpush.bf16.msra.mxu0 %v1564
    %1580 = vmatpush.bf16.msra.mxu0 %v1563
    %1581 = vmatpush.bf16.msra.mxu0 %v1562
    %1582 = vmatpush.bf16.msra.mxu0 %v1561
    %1583 = vmatpush.bf16.msra.mxu0 %v1560
    %1584 = vmatmul.bf16.gmra.mxu0 %v1510
    %v1585 = vpop.f32.mrf.mxu0
    %v1586 = vadd.f32 0.0, %v1585
    %v1587 = vpop.f32.mrf.mxu0
    %1588 = vdwg.mxu0
    %v1589 = vadd.f32 %v1509, %v1586
    %v1590 = vpack.c.bf16 %v1265, %v1265
    %s1591 = scalar_lea.vmem [#allocation2], 256
    %v1592 = vld [vmem:[%s1591] sm:$0xf]
    %v1593 = vld [vmem:[%s1591 + $0x4] sm:$0xf]
    %v1594 = vld [vmem:[%s1591 + $0x8] sm:$0xf]
    %v1595 = vld [vmem:[%s1591 + $0xc] sm:$0xf]
    %v1596 = vld [vmem:[%s1591 + $0x10] sm:$0xf]
    %v1597 = vld [vmem:[%s1591 + $0x14] sm:$0xf]
    %v1598 = vld [vmem:[%s1591 + $0x18] sm:$0xf]
    %v1599 = vld [vmem:[%s1591 + $0x1c] sm:$0xf]
    %v1600 = vld [vmem:[%s1591 + $0x20] sm:$0xf]
    %v1601 = vld [vmem:[%s1591 + $0x24] sm:$0xf]
    %v1602 = vld [vmem:[%s1591 + $0x28] sm:$0xf]
    %v1603 = vld [vmem:[%s1591 + $0x2c] sm:$0xf]
    %v1604 = vld [vmem:[%s1591 + $0x30] sm:$0xf]
    %v1605 = vld [vmem:[%s1591 + $0x34] sm:$0xf]
    %v1606 = vld [vmem:[%s1591 + $0x38] sm:$0xf]
    %v1607 = vld [vmem:[%s1591 + $0x3c] sm:$0xf]
    %v1624 = vunpack.c.l.b16 %v1592
    %v1625 = vunpack.c.l.b16 %v1593
    %v1626 = vunpack.c.l.b16 %v1594
    %v1627 = vunpack.c.l.b16 %v1595
    %v1628 = vunpack.c.l.b16 %v1596
    %v1629 = vunpack.c.l.b16 %v1597
    %v1630 = vunpack.c.l.b16 %v1598
    %v1631 = vunpack.c.l.b16 %v1599
    %v1632 = vunpack.c.l.b16 %v1600
    %v1633 = vunpack.c.l.b16 %v1601
    %v1634 = vunpack.c.l.b16 %v1602
    %v1635 = vunpack.c.l.b16 %v1603
    %v1636 = vunpack.c.l.b16 %v1604
    %v1637 = vunpack.c.l.b16 %v1605
    %v1638 = vunpack.c.l.b16 %v1606
    %v1639 = vunpack.c.l.b16 %v1607
    %v1640 = vpack.c.b16 %v1625, %v1624
    %v1641 = vpack.c.b16 %v1627, %v1626
    %v1642 = vpack.c.b16 %v1629, %v1628
    %v1643 = vpack.c.b16 %v1631, %v1630
    %v1644 = vpack.c.b16 %v1633, %v1632
    %v1645 = vpack.c.b16 %v1635, %v1634
    %v1646 = vpack.c.b16 %v1637, %v1636
    %v1647 = vpack.c.b16 %v1639, %v1638
    %1656 = vmatpush.bf16.msra.mxu0 %v1647
    %1657 = vmatpush.bf16.msra.mxu0 %v1646
    %1658 = vmatpush.bf16.msra.mxu0 %v1645
    %1659 = vmatpush.bf16.msra.mxu0 %v1644
    %1660 = vmatpush.bf16.msra.mxu0 %v1643
    %1661 = vmatpush.bf16.msra.mxu0 %v1642
    %1662 = vmatpush.bf16.msra.mxu0 %v1641
    %1663 = vmatpush.bf16.msra.mxu0 %v1640
    %1664 = vmatmul.bf16.gmra.mxu0 %v1590
    %v1665 = vpop.f32.mrf.mxu0
    %v1666 = vadd.f32 0.0, %v1665
    %v1667 = vpop.f32.mrf.mxu0
    %1668 = vdwg.mxu0
    %v1669 = vadd.f32 %v1589, %v1666
    %v1670 = vpack.c.bf16 %v1266, %v1266
    %s1671 = scalar_lea.vmem [#allocation2], 320
    %v1672 = vld [vmem:[%s1671] sm:$0xf]
    %v1673 = vld [vmem:[%s1671 + $0x4] sm:$0xf]
    %v1674 = vld [vmem:[%s1671 + $0x8] sm:$0xf]
    %v1675 = vld [vmem:[%s1671 + $0xc] sm:$0xf]
    %v1676 = vld [vmem:[%s1671 + $0x10] sm:$0xf]
    %v1677 = vld [vmem:[%s1671 + $0x14] sm:$0xf]
    %v1678 = vld [vmem:[%s1671 + $0x18] sm:$0xf]
    %v1679 = vld [vmem:[%s1671 + $0x1c] sm:$0xf]
    %v1680 = vld [vmem:[%s1671 + $0x20] sm:$0xf]
    %v1681 = vld [vmem:[%s1671 + $0x24] sm:$0xf]
    %v1682 = vld [vmem:[%s1671 + $0x28] sm:$0xf]
    %v1683 = vld [vmem:[%s1671 + $0x2c] sm:$0xf]
    %v1684 = vld [vmem:[%s1671 + $0x30] sm:$0xf]
    %v1685 = vld [vmem:[%s1671 + $0x34] sm:$0xf]
    %v1686 = vld [vmem:[%s1671 + $0x38] sm:$0xf]
    %v1687 = vld [vmem:[%s1671 + $0x3c] sm:$0xf]
    %v1704 = vunpack.c.l.b16 %v1672
    %v1705 = vunpack.c.l.b16 %v1673
    %v1706 = vunpack.c.l.b16 %v1674
    %v1707 = vunpack.c.l.b16 %v1675
    %v1708 = vunpack.c.l.b16 %v1676
    %v1709 = vunpack.c.l.b16 %v1677
    %v1710 = vunpack.c.l.b16 %v1678
    %v1711 = vunpack.c.l.b16 %v1679
    %v1712 = vunpack.c.l.b16 %v1680
    %v1713 = vunpack.c.l.b16 %v1681
    %v1714 = vunpack.c.l.b16 %v1682
    %v1715 = vunpack.c.l.b16 %v1683
    %v1716 = vunpack.c.l.b16 %v1684
    %v1717 = vunpack.c.l.b16 %v1685
    %v1718 = vunpack.c.l.b16 %v1686
    %v1719 = vunpack.c.l.b16 %v1687
    %v1720 = vpack.c.b16 %v1705, %v1704
    %v1721 = vpack.c.b16 %v1707, %v1706
    %v1722 = vpack.c.b16 %v1709, %v1708
    %v1723 = vpack.c.b16 %v1711, %v1710
    %v1724 = vpack.c.b16 %v1713, %v1712
    %v1725 = vpack.c.b16 %v1715, %v1714
    %v1726 = vpack.c.b16 %v1717, %v1716
    %v1727 = vpack.c.b16 %v1719, %v1718
    %1736 = vmatpush.bf16.msra.mxu0 %v1727
    %1737 = vmatpush.bf16.msra.mxu0 %v1726
    %1738 = vmatpush.bf16.msra.mxu0 %v1725
    %1739 = vmatpush.bf16.msra.mxu0 %v1724
    %1740 = vmatpush.bf16.msra.mxu0 %v1723
    %1741 = vmatpush.bf16.msra.mxu0 %v1722
    %1742 = vmatpush.bf16.msra.mxu0 %v1721
    %1743 = vmatpush.bf16.msra.mxu0 %v1720
    %1744 = vmatmul.bf16.gmra.mxu0 %v1670
    %v1745 = vpop.f32.mrf.mxu0
    %v1746 = vadd.f32 0.0, %v1745
    %v1747 = vpop.f32.mrf.mxu0
    %1748 = vdwg.mxu0
    %v1749 = vadd.f32 %v1669, %v1746
    %v1750 = vpack.c.bf16 %v1267, %v1267
    %s1751 = scalar_lea.vmem [#allocation2], 384
    %v1752 = vld [vmem:[%s1751] sm:$0xf]
    %v1753 = vld [vmem:[%s1751 + $0x4] sm:$0xf]
    %v1754 = vld [vmem:[%s1751 + $0x8] sm:$0xf]
    %v1755 = vld [vmem:[%s1751 + $0xc] sm:$0xf]
    %v1756 = vld [vmem:[%s1751 + $0x10] sm:$0xf]
    %v1757 = vld [vmem:[%s1751 + $0x14] sm:$0xf]
    %v1758 = vld [vmem:[%s1751 + $0x18] sm:$0xf]
    %v1759 = vld [vmem:[%s1751 + $0x1c] sm:$0xf]
    %v1760 = vld [vmem:[%s1751 + $0x20] sm:$0xf]
    %v1761 = vld [vmem:[%s1751 + $0x24] sm:$0xf]
    %v1762 = vld [vmem:[%s1751 + $0x28] sm:$0xf]
    %v1763 = vld [vmem:[%s1751 + $0x2c] sm:$0xf]
    %v1764 = vld [vmem:[%s1751 + $0x30] sm:$0xf]
    %v1765 = vld [vmem:[%s1751 + $0x34] sm:$0xf]
    %v1766 = vld [vmem:[%s1751 + $0x38] sm:$0xf]
    %v1767 = vld [vmem:[%s1751 + $0x3c] sm:$0xf]
    %v1784 = vunpack.c.l.b16 %v1752
    %v1785 = vunpack.c.l.b16 %v1753
    %v1786 = vunpack.c.l.b16 %v1754
    %v1787 = vunpack.c.l.b16 %v1755
    %v1788 = vunpack.c.l.b16 %v1756
    %v1789 = vunpack.c.l.b16 %v1757
    %v1790 = vunpack.c.l.b16 %v1758
    %v1791 = vunpack.c.l.b16 %v1759
    %v1792 = vunpack.c.l.b16 %v1760
    %v1793 = vunpack.c.l.b16 %v1761
    %v1794 = vunpack.c.l.b16 %v1762
    %v1795 = vunpack.c.l.b16 %v1763
    %v1796 = vunpack.c.l.b16 %v1764
    %v1797 = vunpack.c.l.b16 %v1765
    %v1798 = vunpack.c.l.b16 %v1766
    %v1799 = vunpack.c.l.b16 %v1767
    %v1800 = vpack.c.b16 %v1785, %v1784
    %v1801 = vpack.c.b16 %v1787, %v1786
    %v1802 = vpack.c.b16 %v1789, %v1788
    %v1803 = vpack.c.b16 %v1791, %v1790
    %v1804 = vpack.c.b16 %v1793, %v1792
    %v1805 = vpack.c.b16 %v1795, %v1794
    %v1806 = vpack.c.b16 %v1797, %v1796
    %v1807 = vpack.c.b16 %v1799, %v1798
    %1816 = vmatpush.bf16.msra.mxu0 %v1807
    %1817 = vmatpush.bf16.msra.mxu0 %v1806
    %1818 = vmatpush.bf16.msra.mxu0 %v1805
    %1819 = vmatpush.bf16.msra.mxu0 %v1804
    %1820 = vmatpush.bf16.msra.mxu0 %v1803
    %1821 = vmatpush.bf16.msra.mxu0 %v1802
    %1822 = vmatpush.bf16.msra.mxu0 %v1801
    %1823 = vmatpush.bf16.msra.mxu0 %v1800
    %1824 = vmatmul.bf16.gmra.mxu0 %v1750
    %v1825 = vpop.f32.mrf.mxu0
    %v1826 = vadd.f32 0.0, %v1825
    %v1827 = vpop.f32.mrf.mxu0
    %1828 = vdwg.mxu0
    %v1829 = vadd.f32 %v1749, %v1826
    %v1830 = vpack.c.bf16 %v1268, %v1268
    %s1831 = scalar_lea.vmem [#allocation2], 448
    %v1832 = vld [vmem:[%s1831] sm:$0xf]
    %v1833 = vld [vmem:[%s1831 + $0x4] sm:$0xf]
    %v1834 = vld [vmem:[%s1831 + $0x8] sm:$0xf]
    %v1835 = vld [vmem:[%s1831 + $0xc] sm:$0xf]
    %v1836 = vld [vmem:[%s1831 + $0x10] sm:$0xf]
    %v1837 = vld [vmem:[%s1831 + $0x14] sm:$0xf]
    %v1838 = vld [vmem:[%s1831 + $0x18] sm:$0xf]
    %v1839 = vld [vmem:[%s1831 + $0x1c] sm:$0xf]
    %v1840 = vld [vmem:[%s1831 + $0x20] sm:$0xf]
    %v1841 = vld [vmem:[%s1831 + $0x24] sm:$0xf]
    %v1842 = vld [vmem:[%s1831 + $0x28] sm:$0xf]
    %v1843 = vld [vmem:[%s1831 + $0x2c] sm:$0xf]
    %v1844 = vld [vmem:[%s1831 + $0x30] sm:$0xf]
    %v1845 = vld [vmem:[%s1831 + $0x34] sm:$0xf]
    %v1846 = vld [vmem:[%s1831 + $0x38] sm:$0xf]
    %v1847 = vld [vmem:[%s1831 + $0x3c] sm:$0xf]
    %v1864 = vunpack.c.l.b16 %v1832
    %v1865 = vunpack.c.l.b16 %v1833
    %v1866 = vunpack.c.l.b16 %v1834
    %v1867 = vunpack.c.l.b16 %v1835
    %v1868 = vunpack.c.l.b16 %v1836
    %v1869 = vunpack.c.l.b16 %v1837
    %v1870 = vunpack.c.l.b16 %v1838
    %v1871 = vunpack.c.l.b16 %v1839
    %v1872 = vunpack.c.l.b16 %v1840
    %v1873 = vunpack.c.l.b16 %v1841
    %v1874 = vunpack.c.l.b16 %v1842
    %v1875 = vunpack.c.l.b16 %v1843
    %v1876 = vunpack.c.l.b16 %v1844
    %v1877 = vunpack.c.l.b16 %v1845
    %v1878 = vunpack.c.l.b16 %v1846
    %v1879 = vunpack.c.l.b16 %v1847
    %v1880 = vpack.c.b16 %v1865, %v1864
    %v1881 = vpack.c.b16 %v1867, %v1866
    %v1882 = vpack.c.b16 %v1869, %v1868
    %v1883 = vpack.c.b16 %v1871, %v1870
    %v1884 = vpack.c.b16 %v1873, %v1872
    %v1885 = vpack.c.b16 %v1875, %v1874
    %v1886 = vpack.c.b16 %v1877, %v1876
    %v1887 = vpack.c.b16 %v1879, %v1878
    %1896 = vmatpush.bf16.msra.mxu0 %v1887
    %1897 = vmatpush.bf16.msra.mxu0 %v1886
    %1898 = vmatpush.bf16.msra.mxu0 %v1885
    %1899 = vmatpush.bf16.msra.mxu0 %v1884
    %1900 = vmatpush.bf16.msra.mxu0 %v1883
    %1901 = vmatpush.bf16.msra.mxu0 %v1882
    %1902 = vmatpush.bf16.msra.mxu0 %v1881
    %1903 = vmatpush.bf16.msra.mxu0 %v1880
    %1904 = vmatmul.bf16.gmra.mxu0 %v1830
    %v1905 = vpop.f32.mrf.mxu0
    %v1906 = vadd.f32 0.0, %v1905
    %v1907 = vpop.f32.mrf.mxu0
    %1908 = vdwg.mxu0
    %v1909 = vadd.f32 %v1829, %v1906
    %v1910 = vpack.c.bf16 %v1269, %v1269
    %s1911 = scalar_lea.vmem [#allocation2], 512
    %v1912 = vld [vmem:[%s1911] sm:$0xf]
    %v1913 = vld [vmem:[%s1911 + $0x4] sm:$0xf]
    %v1914 = vld [vmem:[%s1911 + $0x8] sm:$0xf]
    %v1915 = vld [vmem:[%s1911 + $0xc] sm:$0xf]
    %v1916 = vld [vmem:[%s1911 + $0x10] sm:$0xf]
    %v1917 = vld [vmem:[%s1911 + $0x14] sm:$0xf]
    %v1918 = vld [vmem:[%s1911 + $0x18] sm:$0xf]
    %v1919 = vld [vmem:[%s1911 + $0x1c] sm:$0xf]
    %v1920 = vld [vmem:[%s1911 + $0x20] sm:$0xf]
    %v1921 = vld [vmem:[%s1911 + $0x24] sm:$0xf]
    %v1922 = vld [vmem:[%s1911 + $0x28] sm:$0xf]
    %v1923 = vld [vmem:[%s1911 + $0x2c] sm:$0xf]
    %v1924 = vld [vmem:[%s1911 + $0x30] sm:$0xf]
    %v1925 = vld [vmem:[%s1911 + $0x34] sm:$0xf]
    %v1926 = vld [vmem:[%s1911 + $0x38] sm:$0xf]
    %v1927 = vld [vmem:[%s1911 + $0x3c] sm:$0xf]
    %v1944 = vunpack.c.l.b16 %v1912
    %v1945 = vunpack.c.l.b16 %v1913
    %v1946 = vunpack.c.l.b16 %v1914
    %v1947 = vunpack.c.l.b16 %v1915
    %v1948 = vunpack.c.l.b16 %v1916
    %v1949 = vunpack.c.l.b16 %v1917
    %v1950 = vunpack.c.l.b16 %v1918
    %v1951 = vunpack.c.l.b16 %v1919
    %v1952 = vunpack.c.l.b16 %v1920
    %v1953 = vunpack.c.l.b16 %v1921
    %v1954 = vunpack.c.l.b16 %v1922
    %v1955 = vunpack.c.l.b16 %v1923
    %v1956 = vunpack.c.l.b16 %v1924
    %v1957 = vunpack.c.l.b16 %v1925
    %v1958 = vunpack.c.l.b16 %v1926
    %v1959 = vunpack.c.l.b16 %v1927
    %v1960 = vpack.c.b16 %v1945, %v1944
    %v1961 = vpack.c.b16 %v1947, %v1946
    %v1962 = vpack.c.b16 %v1949, %v1948
    %v1963 = vpack.c.b16 %v1951, %v1950
    %v1964 = vpack.c.b16 %v1953, %v1952
    %v1965 = vpack.c.b16 %v1955, %v1954
    %v1966 = vpack.c.b16 %v1957, %v1956
    %v1967 = vpack.c.b16 %v1959, %v1958
    %1976 = vmatpush.bf16.msra.mxu0 %v1967
    %1977 = vmatpush.bf16.msra.mxu0 %v1966
    %1978 = vmatpush.bf16.msra.mxu0 %v1965
    %1979 = vmatpush.bf16.msra.mxu0 %v1964
    %1980 = vmatpush.bf16.msra.mxu0 %v1963
    %1981 = vmatpush.bf16.msra.mxu0 %v1962
    %1982 = vmatpush.bf16.msra.mxu0 %v1961
    %1983 = vmatpush.bf16.msra.mxu0 %v1960
    %1984 = vmatmul.bf16.gmra.mxu0 %v1910
    %v1985 = vpop.f32.mrf.mxu0
    %v1986 = vadd.f32 0.0, %v1985
    %v1987 = vpop.f32.mrf.mxu0
    %1988 = vdwg.mxu0
    %v1989 = vadd.f32 %v1909, %v1986
    %v1990 = vpack.c.bf16 %v1270, %v1270
    %s1991 = scalar_lea.vmem [#allocation2], 576
    %v1992 = vld [vmem:[%s1991] sm:$0xf]
    %v1993 = vld [vmem:[%s1991 + $0x4] sm:$0xf]
    %v1994 = vld [vmem:[%s1991 + $0x8] sm:$0xf]
    %v1995 = vld [vmem:[%s1991 + $0xc] sm:$0xf]
    %v1996 = vld [vmem:[%s1991 + $0x10] sm:$0xf]
    %v1997 = vld [vmem:[%s1991 + $0x14] sm:$0xf]
    %v1998 = vld [vmem:[%s1991 + $0x18] sm:$0xf]
    %v1999 = vld [vmem:[%s1991 + $0x1c] sm:$0xf]
    %v2000 = vld [vmem:[%s1991 + $0x20] sm:$0xf]
    %v2001 = vld [vmem:[%s1991 + $0x24] sm:$0xf]
    %v2002 = vld [vmem:[%s1991 + $0x28] sm:$0xf]
    %v2003 = vld [vmem:[%s1991 + $0x2c] sm:$0xf]
    %v2004 = vld [vmem:[%s1991 + $0x30] sm:$0xf]
    %v2005 = vld [vmem:[%s1991 + $0x34] sm:$0xf]
    %v2006 = vld [vmem:[%s1991 + $0x38] sm:$0xf]
    %v2007 = vld [vmem:[%s1991 + $0x3c] sm:$0xf]
    %v2024 = vunpack.c.l.b16 %v1992
    %v2025 = vunpack.c.l.b16 %v1993
    %v2026 = vunpack.c.l.b16 %v1994
    %v2027 = vunpack.c.l.b16 %v1995
    %v2028 = vunpack.c.l.b16 %v1996
    %v2029 = vunpack.c.l.b16 %v1997
    %v2030 = vunpack.c.l.b16 %v1998
    %v2031 = vunpack.c.l.b16 %v1999
    %v2032 = vunpack.c.l.b16 %v2000
    %v2033 = vunpack.c.l.b16 %v2001
    %v2034 = vunpack.c.l.b16 %v2002
    %v2035 = vunpack.c.l.b16 %v2003
    %v2036 = vunpack.c.l.b16 %v2004
    %v2037 = vunpack.c.l.b16 %v2005
    %v2038 = vunpack.c.l.b16 %v2006
    %v2039 = vunpack.c.l.b16 %v2007
    %v2040 = vpack.c.b16 %v2025, %v2024
    %v2041 = vpack.c.b16 %v2027, %v2026
    %v2042 = vpack.c.b16 %v2029, %v2028
    %v2043 = vpack.c.b16 %v2031, %v2030
    %v2044 = vpack.c.b16 %v2033, %v2032
    %v2045 = vpack.c.b16 %v2035, %v2034
    %v2046 = vpack.c.b16 %v2037, %v2036
    %v2047 = vpack.c.b16 %v2039, %v2038
    %2056 = vmatpush.bf16.msra.mxu0 %v2047
    %2057 = vmatpush.bf16.msra.mxu0 %v2046
    %2058 = vmatpush.bf16.msra.mxu0 %v2045
    %2059 = vmatpush.bf16.msra.mxu0 %v2044
    %2060 = vmatpush.bf16.msra.mxu0 %v2043
    %2061 = vmatpush.bf16.msra.mxu0 %v2042
    %2062 = vmatpush.bf16.msra.mxu0 %v2041
    %2063 = vmatpush.bf16.msra.mxu0 %v2040
    %2064 = vmatmul.bf16.gmra.mxu0 %v1990
    %v2065 = vpop.f32.mrf.mxu0
    %v2066 = vadd.f32 0.0, %v2065
    %v2067 = vpop.f32.mrf.mxu0
    %2068 = vdwg.mxu0
    %v2069 = vadd.f32 %v1989, %v2066
    %v2070 = vpack.c.bf16 %v1271, %v1271
    %s2071 = scalar_lea.vmem [#allocation2], 640
    %v2072 = vld [vmem:[%s2071] sm:$0xf]
    %v2073 = vld [vmem:[%s2071 + $0x4] sm:$0xf]
    %v2074 = vld [vmem:[%s2071 + $0x8] sm:$0xf]
    %v2075 = vld [vmem:[%s2071 + $0xc] sm:$0xf]
    %v2076 = vld [vmem:[%s2071 + $0x10] sm:$0xf]
    %v2077 = vld [vmem:[%s2071 + $0x14] sm:$0xf]
    %v2078 = vld [vmem:[%s2071 + $0x18] sm:$0xf]
    %v2079 = vld [vmem:[%s2071 + $0x1c] sm:$0xf]
    %v2080 = vld [vmem:[%s2071 + $0x20] sm:$0xf]
    %v2081 = vld [vmem:[%s2071 + $0x24] sm:$0xf]
    %v2082 = vld [vmem:[%s2071 + $0x28] sm:$0xf]
    %v2083 = vld [vmem:[%s2071 + $0x2c] sm:$0xf]
    %v2084 = vld [vmem:[%s2071 + $0x30] sm:$0xf]
    %v2085 = vld [vmem:[%s2071 + $0x34] sm:$0xf]
    %v2086 = vld [vmem:[%s2071 + $0x38] sm:$0xf]
    %v2087 = vld [vmem:[%s2071 + $0x3c] sm:$0xf]
    %v2104 = vunpack.c.l.b16 %v2072
    %v2105 = vunpack.c.l.b16 %v2073
    %v2106 = vunpack.c.l.b16 %v2074
    %v2107 = vunpack.c.l.b16 %v2075
    %v2108 = vunpack.c.l.b16 %v2076
    %v2109 = vunpack.c.l.b16 %v2077
    %v2110 = vunpack.c.l.b16 %v2078
    %v2111 = vunpack.c.l.b16 %v2079
    %v2112 = vunpack.c.l.b16 %v2080
    %v2113 = vunpack.c.l.b16 %v2081
    %v2114 = vunpack.c.l.b16 %v2082
    %v2115 = vunpack.c.l.b16 %v2083
    %v2116 = vunpack.c.l.b16 %v2084
    %v2117 = vunpack.c.l.b16 %v2085
    %v2118 = vunpack.c.l.b16 %v2086
    %v2119 = vunpack.c.l.b16 %v2087
    %v2120 = vpack.c.b16 %v2105, %v2104
    %v2121 = vpack.c.b16 %v2107, %v2106
    %v2122 = vpack.c.b16 %v2109, %v2108
    %v2123 = vpack.c.b16 %v2111, %v2110
    %v2124 = vpack.c.b16 %v2113, %v2112
    %v2125 = vpack.c.b16 %v2115, %v2114
    %v2126 = vpack.c.b16 %v2117, %v2116
    %v2127 = vpack.c.b16 %v2119, %v2118
    %2136 = vmatpush.bf16.msra.mxu0 %v2127
    %2137 = vmatpush.bf16.msra.mxu0 %v2126
    %2138 = vmatpush.bf16.msra.mxu0 %v2125
    %2139 = vmatpush.bf16.msra.mxu0 %v2124
    %2140 = vmatpush.bf16.msra.mxu0 %v2123
    %2141 = vmatpush.bf16.msra.mxu0 %v2122
    %2142 = vmatpush.bf16.msra.mxu0 %v2121
    %2143 = vmatpush.bf16.msra.mxu0 %v2120
    %2144 = vmatmul.bf16.gmra.mxu0 %v2070
    %v2145 = vpop.f32.mrf.mxu0
    %v2146 = vadd.f32 0.0, %v2145
    %v2147 = vpop.f32.mrf.mxu0
    %2148 = vdwg.mxu0
    %v2149 = vadd.f32 %v2069, %v2146
    %v2150 = vpack.c.bf16 %v1272, %v1272
    %s2151 = scalar_lea.vmem [#allocation2], 704
    %v2152 = vld [vmem:[%s2151] sm:$0xf]
    %v2153 = vld [vmem:[%s2151 + $0x4] sm:$0xf]
    %v2154 = vld [vmem:[%s2151 + $0x8] sm:$0xf]
    %v2155 = vld [vmem:[%s2151 + $0xc] sm:$0xf]
    %v2156 = vld [vmem:[%s2151 + $0x10] sm:$0xf]
    %v2157 = vld [vmem:[%s2151 + $0x14] sm:$0xf]
    %v2158 = vld [vmem:[%s2151 + $0x18] sm:$0xf]
    %v2159 = vld [vmem:[%s2151 + $0x1c] sm:$0xf]
    %v2160 = vld [vmem:[%s2151 + $0x20] sm:$0xf]
    %v2161 = vld [vmem:[%s2151 + $0x24] sm:$0xf]
    %v2162 = vld [vmem:[%s2151 + $0x28] sm:$0xf]
    %v2163 = vld [vmem:[%s2151 + $0x2c] sm:$0xf]
    %v2164 = vld [vmem:[%s2151 + $0x30] sm:$0xf]
    %v2165 = vld [vmem:[%s2151 + $0x34] sm:$0xf]
    %v2166 = vld [vmem:[%s2151 + $0x38] sm:$0xf]
    %v2167 = vld [vmem:[%s2151 + $0x3c] sm:$0xf]
    %v2184 = vunpack.c.l.b16 %v2152
    %v2185 = vunpack.c.l.b16 %v2153
    %v2186 = vunpack.c.l.b16 %v2154
    %v2187 = vunpack.c.l.b16 %v2155
    %v2188 = vunpack.c.l.b16 %v2156
    %v2189 = vunpack.c.l.b16 %v2157
    %v2190 = vunpack.c.l.b16 %v2158
    %v2191 = vunpack.c.l.b16 %v2159
    %v2192 = vunpack.c.l.b16 %v2160
    %v2193 = vunpack.c.l.b16 %v2161
    %v2194 = vunpack.c.l.b16 %v2162
    %v2195 = vunpack.c.l.b16 %v2163
    %v2196 = vunpack.c.l.b16 %v2164
    %v2197 = vunpack.c.l.b16 %v2165
    %v2198 = vunpack.c.l.b16 %v2166
    %v2199 = vunpack.c.l.b16 %v2167
    %v2200 = vpack.c.b16 %v2185, %v2184
    %v2201 = vpack.c.b16 %v2187, %v2186
    %v2202 = vpack.c.b16 %v2189, %v2188
    %v2203 = vpack.c.b16 %v2191, %v2190
    %v2204 = vpack.c.b16 %v2193, %v2192
    %v2205 = vpack.c.b16 %v2195, %v2194
    %v2206 = vpack.c.b16 %v2197, %v2196
    %v2207 = vpack.c.b16 %v2199, %v2198
    %2216 = vmatpush.bf16.msra.mxu0 %v2207
    %2217 = vmatpush.bf16.msra.mxu0 %v2206
    %2218 = vmatpush.bf16.msra.mxu0 %v2205
    %2219 = vmatpush.bf16.msra.mxu0 %v2204
    %2220 = vmatpush.bf16.msra.mxu0 %v2203
    %2221 = vmatpush.bf16.msra.mxu0 %v2202
    %2222 = vmatpush.bf16.msra.mxu0 %v2201
    %2223 = vmatpush.bf16.msra.mxu0 %v2200
    %2224 = vmatmul.bf16.gmra.mxu0 %v2150
    %v2225 = vpop.f32.mrf.mxu0
    %v2226 = vadd.f32 0.0, %v2225
    %v2227 = vpop.f32.mrf.mxu0
    %2228 = vdwg.mxu0
    %v2229 = vadd.f32 %v2149, %v2226
    %v2230 = vld [vmem:[%s4] sm:$0x1]
    %v2232 = vperm.slane %v2230, 0
    %v2234 = vadd.f32 %v2229, %v2232
    %v2235 = vmax.f32 %v2234, 0.0
    %v2236 = vpack.c.bf16 %v2235, %v2235
    %v2237 = vld [vmem:[%s5] sm:$0xf]
    %v2238 = vld [vmem:[%s5 + $0x4] sm:$0xf]
    %v2239 = vld [vmem:[%s5 + $0x8] sm:$0xf]
    %v2240 = vld [vmem:[%s5 + $0xc] sm:$0xf]
    %v2241 = vld [vmem:[%s5 + $0x10] sm:$0xf]
    %v2242 = vld [vmem:[%s5 + $0x14] sm:$0xf]
    %v2243 = vld [vmem:[%s5 + $0x18] sm:$0xf]
    %v2244 = vld [vmem:[%s5 + $0x1c] sm:$0xf]
    %v2245 = vld [vmem:[%s5 + $0x20] sm:$0xf]
    %v2246 = vld [vmem:[%s5 + $0x24] sm:$0xf]
    %v2247 = vld [vmem:[%s5 + $0x28] sm:$0xf]
    %v2248 = vld [vmem:[%s5 + $0x2c] sm:$0xf]
    %v2249 = vld [vmem:[%s5 + $0x30] sm:$0xf]
    %v2250 = vld [vmem:[%s5 + $0x34] sm:$0xf]
    %v2251 = vld [vmem:[%s5 + $0x38] sm:$0xf]
    %v2252 = vld [vmem:[%s5 + $0x3c] sm:$0xf]
    %v2253 = vld [vmem:[%s6] sm:$0x1]
    %v2255 = vperm.slane %v2253, 0
    %v2273 = vunpack.c.l.b16 %v2237
    %v2274 = vunpack.c.l.b16 %v2238
    %v2275 = vunpack.c.l.b16 %v2239
    %v2276 = vunpack.c.l.b16 %v2240
    %v2277 = vunpack.c.l.b16 %v2241
    %v2278 = vunpack.c.l.b16 %v2242
    %v2279 = vunpack.c.l.b16 %v2243
    %v2280 = vunpack.c.l.b16 %v2244
    %v2281 = vunpack.c.l.b16 %v2245
    %v2282 = vunpack.c.l.b16 %v2246
    %v2283 = vunpack.c.l.b16 %v2247
    %v2284 = vunpack.c.l.b16 %v2248
    %v2285 = vunpack.c.l.b16 %v2249
    %v2286 = vunpack.c.l.b16 %v2250
    %v2287 = vunpack.c.l.b16 %v2251
    %v2288 = vunpack.c.l.b16 %v2252
    %v2289 = vpack.c.b16 %v2274, %v2273
    %v2290 = vpack.c.b16 %v2276, %v2275
    %v2291 = vpack.c.b16 %v2278, %v2277
    %v2292 = vpack.c.b16 %v2280, %v2279
    %v2293 = vpack.c.b16 %v2282, %v2281
    %v2294 = vpack.c.b16 %v2284, %v2283
    %v2295 = vpack.c.b16 %v2286, %v2285
    %v2296 = vpack.c.b16 %v2288, %v2287
    %2305 = vmatpush.bf16.msra.mxu0 %v2296
    %2306 = vmatpush.bf16.msra.mxu0 %v2295
    %2307 = vmatpush.bf16.msra.mxu0 %v2294
    %2308 = vmatpush.bf16.msra.mxu0 %v2293
    %2309 = vmatpush.bf16.msra.mxu0 %v2292
    %2310 = vmatpush.bf16.msra.mxu0 %v2291
    %2311 = vmatpush.bf16.msra.mxu0 %v2290
    %2312 = vmatpush.bf16.msra.mxu0 %v2289
    %2313 = vmatmul.bf16.gmra.mxu0 %v2236
    %v2314 = vpop.f32.mrf.mxu0
    %v2315 = vadd.f32 %v2255, %v2314
    %v2316 = vpop.f32.mrf.mxu0
    %2317 = vdwg.mxu0
    %2318 = vmax.xlane.f32.xlu0 %v2315
    %v2319 = vpop.xlane.xlu0 %2318
    %v2320 = vsub.f32 %v2315, %v2319
    %v2321 = vmul.f32 %v2320, 1.442695
    %v2322 = vpow.pop %v2321
    %2323 = vadd.xlane.f32.xlu0 %v2322
    %v2324 = vpop.xlane.xlu0 %2323
    %v2325 = vrcp.pop %v2324
    %v2326 = vmul.f32 %v2324, %v2325
    %v2327 = vsub.f32 1.0, %v2326
    %v2328 = vmul.f32 %v2325, %v2327
    %v2329 = vadd.f32 %v2325, %v2328
    %vm2330 = vweird.f32 %v2324
    %vm2331 = vweird.f32 %v2325
    %vm2332 = vmor %vm2330, %vm2331
    %v2333 = vsel %vm2332, %v2325, %v2329
    %v2334 = vand.u32 2147483647, %v2324
    %vm2335 = vcmp.eq.f32.partialorder %v2334, 8.507059e+37
    %v2336 = vand.u32 %v2324, 2147483648
    %v2337 = vor.u32 1.1754944e-38, %v2336
    %v2338 = vsel %vm2335, %v2337, %v2333
    %v2339 = vmul.f32 %v2322, %v2338
    %2340 = vst [vmem:[%s7] sm:$0xff] %v2339
    // Predicated region
    $region34: #{fused_net_forward.1} parent=1 // pred_check
      _
    $region35: #{fused_net_forward.1} parent=1 // pred_check_branch
      %2342 = sbr.rel (0) target = $region37
    $region36: #{fused_net_forward.1} parent=1 // pred_region
      _
    $region37: #{fused_net_forward.1} parent=1 // pred_fallthru
      _
    // Predicated region
    $region38: #{fused_net_forward.1} parent=1 // pred_check
      _
    $region39: #{fused_net_forward.1} parent=1 // pred_check_branch
      %2344 = sbr.rel (0) target = $region41
    $region40: #{fused_net_forward.1} parent=1 // pred_region
      _
    $region41: #{fused_net_forward.1} parent=1 // pred_fallthru
      _
    %2345 = vsyncpa [#allocation3], 1

</llo_original>
